<compile_context>
chip_gen: v7x
topology: tpu7x:2x2x1
jax: 0.10.0
libtpu: 0.0.40
codegen_flags: <defaults>
</compile_context>

<pallas_src>
import jax
import jax.numpy as jnp
import numpy as np
from jax.experimental import pallas as pl
from jax.experimental.pallas import tpu as pltpu


# ---------------------------------------------------------------------------
# Pallas kernel: one (batch tile, spatial tile) per grid step.
# ---------------------------------------------------------------------------
def _highlight_kernel(x_ref, wres_ref, w1_ref, w2_ref, fc1w_ref, fc2w_ref,
                      bhd_ref, bfc_ref, out_ref, pool_ref):
    s_idx = pl.program_id(1)
    n_s = pl.num_programs(1)

    x = x_ref[...]                                   # (Bt, T, Ss, C) bf16
    Bt, T, Ss, C = x.shape
    Hdp = wres_ref.shape[1]                          # hidden dim padded to 128
    rows = Bt * T * Ss

    b_res = bhd_ref[0:1, :]                          # (1, Hdp) f32
    b_c1 = bhd_ref[1:2, :]
    b_c2 = bhd_ref[2:3, :]

    def conv_t3(h, w_ref, b):
        # Temporal 3-tap conv (kernel (3,1,1), padding (1,0,0)) as three
        # accumulating MXU matmuls on time-shifted row views.  The shifts are
        # leading-axis (T) concats with a zero frame -> no lane relayout.
        Cin = h.shape[-1]
        zero = jnp.zeros((Bt, 1, Ss, Cin), h.dtype)
        h_prev = jnp.concatenate([zero, h[:, :-1]], axis=1).reshape(rows, Cin)
        h_next = jnp.concatenate([h[:, 1:], zero], axis=1).reshape(rows, Cin)
        acc = jnp.dot(h_prev, w_ref[0], preferred_element_type=jnp.float32)
        acc = acc + jnp.dot(h.reshape(rows, Cin), w_ref[1],
                            preferred_element_type=jnp.float32)
        acc = acc + jnp.dot(h_next, w_ref[2],
                            preferred_element_type=jnp.float32)
        return acc + b

    # residual = Conv3d(C -> Hd, 1x1x1): plain channel matmul on flat rows.
    res = jnp.dot(x.reshape(rows, C), wres_ref[...],
                  preferred_element_type=jnp.float32) + b_res

    # conv1 (+ folded bn1) -> relu
    h = jnp.maximum(conv_t3(x, w1_ref, b_c1), 0.0)
    h = h.astype(x.dtype).reshape(Bt, T, Ss, Hdp)

    # conv2 (+ folded bn2) -> relu -> + residual  (fused elementwise pass).
    h2 = jnp.maximum(conv_t3(h, w2_ref, b_c2), 0.0) + res       # (rows, Hdp) f32

    # Partial spatial sum for AdaptiveAvgPool3d((None,1,1)); the 1/S divisor is
    # folded into fc1w in the wrapper, so only a sum is accumulated here.
    part = jnp.sum(h2.reshape(Bt * T, Ss, Hdp), axis=1)          # (Bt*T, Hdp)

    @pl.when(s_idx == 0)
    def _():
        pool_ref[...] = jnp.zeros_like(pool_ref)

    pool_ref[...] += part

    # Finalize on the last spatial tile: fc1 -> relu -> fc2 (dropout = identity
    # in eval mode), lane-dense (128-wide) store.
    @pl.when(s_idx == n_s - 1)
    def _():
        b_fc1 = bfc_ref[0:1, :]
        b_fc2 = bfc_ref[1:2, :]
        pooled = pool_ref[...].astype(x.dtype)                   # (Bt*T, Hdp)
        f1 = jnp.maximum(
            jnp.dot(pooled, fc1w_ref[...],
                    preferred_element_type=jnp.float32) + b_fc1, 0.0)
        out = jnp.dot(f1.astype(x.dtype), fc2w_ref[...],
                      preferred_element_type=jnp.float32) + b_fc2
        out_ref[...] = out.reshape(Bt, T, -1)


# ---------------------------------------------------------------------------
# Wrapper
# ---------------------------------------------------------------------------
def _pick_block_s(S, cap=512):
    # Largest multiple-of-8 divisor of S (<= cap) that still yields >= 2
    # spatial steps; fall back to a single spatial step (block_s = S).
    best = None
    for d in range(8, min(S // 2, cap) + 1, 8):
        if S % d == 0:
            best = d
    return best if best is not None else S


def highlight_detection_head(x_ncthw, p, block_b=None, block_s=None,
                             compute_dtype=jnp.bfloat16):
    """x_ncthw: [B, C, T, H, W] float32 -> [B, T, num_classes] float32.

    block_b / block_s are the tuning knobs: pick them so the grid has >= 2
    steps (>= 4 on v7x, which shards the batch axis across 2 TensorCores) and
    the per-step working set stays well under the per-chip VMEM budget
    (~24-28 MiB on v7x, larger on v5e/v6e).
    """
    B, C, T, H, W = x_ncthw.shape
    S = H * W
    Hd = p['wres'].shape[1]
    NC = p['fc2w'].shape[1]
    LANE = 128
    Hdp = ((Hd + LANE - 1) // LANE) * LANE           # hidden dim, lane-padded
    NCpad = LANE
    assert NC <= NCpad, "num_classes > 128 not supported by this kernel"

    # NCTHW -> channels-last [B, T, S, C]; cast matmul operand to bf16.
    x = jnp.transpose(x_ncthw, (0, 2, 3, 4, 1)).reshape(B, T, S, C)
    x = x.astype(compute_dtype)

    def pad_last(w, n):
        return jnp.pad(w, [(0, 0)] * (w.ndim - 1) + [(0, n - w.shape[-1])])

    # Fold eval-mode BatchNorm into conv weights / biases; zero-pad the hidden
    # dim to 128 lanes (padded rows/cols are exactly zero -> no leakage).
    w1f = p['w1'] * p['s1'][None, None, :]                        # (3, C, Hd)
    b1f = p['b1'] * p['s1'] + p['o1']
    w2f = p['w2'] * p['s2'][None, None, :]                        # (3, Hd, Hd)
    b2f = p['b2'] * p['s2'] + p['o2']

    wres_p = pad_last(p['wres'], Hdp).astype(compute_dtype)       # (C, Hdp)
    w1_p = pad_last(w1f, Hdp).astype(compute_dtype)               # (3, C, Hdp)
    w2_p = jnp.pad(w2f, ((0, 0), (0, Hdp - Hd), (0, Hdp - Hd))
                   ).astype(compute_dtype)                        # (3, Hdp, Hdp)
    # fold 1/S (true spatial size) of the average pool into fc1's weight rows.
    fc1w_p = jnp.pad(p['fc1w'] / float(S), ((0, Hdp - Hd), (0, 0))
                     ).astype(compute_dtype)                      # (Hdp, 128)
    fc2w_p = jnp.pad(p['fc2w'], ((0, 0), (0, NCpad - NC))
                     ).astype(compute_dtype)                      # (128, NCpad)

    # Pack the small 1-D biases into two 2-D f32 refs.
    bias_hd = jnp.stack([pad_last(p['bres'], Hdp),
                         pad_last(b1f, Hdp),
                         pad_last(b2f, Hdp)], axis=0).astype(jnp.float32)
    bias_fc = jnp.stack([p['fc1b'],
                         jnp.pad(p['fc2b'], (0, NCpad - NC))],
                        axis=0).astype(jnp.float32)               # (2, 128)

    # --- block / grid selection -------------------------------------------
    if block_b is None:
        block_b = 1 if B > 1 else B                 # >= 2 grid steps when B > 1
    assert B % block_b == 0
    if block_s is None:
        block_s = _pick_block_s(S)
    assert S % block_s == 0
    assert block_s == S or block_s % 8 == 0, \
        "block_s must be the full spatial size or a multiple of 8"
    grid = (B // block_b, S // block_s)

    # Rough per-step live set -> scoped VMEM limit (clamped so it is valid on
    # v5e/v6e/v7x alike; raise block sizes + this limit together on v6e).
    itemsize = jnp.dtype(compute_dtype).itemsize
    rows_step = block_b * T * block_s
    step_bytes = (rows_step * Hdp * (3 * 4 + 3 * itemsize)   # res/acc/h2 + h/prev/next
                  + rows_step * C * 4 * itemsize             # x block (+ shifts, 2x buf)
                  + block_b * T * Hdp * 4                    # pool scratch
                  + block_b * T * NCpad * 4 * 2              # out block (2x buf)
                  + (4 * C + 4 * Hdp + 2 * LANE) * Hdp * itemsize)  # weights
    vmem_limit = int(min(64 << 20, max(32 << 20, 4 * step_bytes)))

    def full_spec(shape):
        nd = len(shape)
        return pl.BlockSpec(shape, lambda b, s, nd=nd: (0,) * nd)

    out = pl.pallas_call(
        _highlight_kernel,
        out_shape=jax.ShapeDtypeStruct((B, T, NCpad), jnp.float32),
        grid_spec=pltpu.PrefetchScalarGridSpec(
            num_scalar_prefetch=0,
            grid=grid,
            in_specs=[
                pl.BlockSpec((block_b, T, block_s, C),
                             lambda b, s: (b, 0, s, 0)),          # x
                full_spec((C, Hdp)),                              # residual w
                full_spec((3, C, Hdp)),                           # conv1 (BN-folded)
                full_spec((3, Hdp, Hdp)),                         # conv2 (BN-folded)
                full_spec((Hdp, 128)),                            # fc1 w (1/S folded)
                full_spec((128, NCpad)),                          # fc2 w (padded)
                full_spec((3, Hdp)),                              # packed hidden biases
                full_spec((2, NCpad)),                            # packed fc biases
            ],
            out_specs=pl.BlockSpec((block_b, T, NCpad),
                                   lambda b, s: (b, 0, 0)),
            scratch_shapes=[pltpu.VMEM((block_b * T, Hdp), jnp.float32)],
        ),
        compiler_params=pltpu.CompilerParams(
            dimension_semantics=("parallel", "arbitrary"),
            vmem_limit_bytes=vmem_limit),
    )(x, wres_p, w1_p, w2_p, fc1w_p, fc2w_p, bias_hd, bias_fc)

    return out[:, :, :NC]


# ---------------------------------------------------------------------------
# Pure-JAX reference (mirrors the PyTorch eval-mode forward, f32 throughout)
# ---------------------------------------------------------------------------
def reference_forward(x, p):
    # x: [B, C, T, H, W]
    T = x.shape[2]

    def conv_t3(h, w, b):
        hp = jnp.pad(h, ((0, 0), (0, 0), (1, 1), (0, 0), (0, 0)))
        out = 0.0
        for k in range(3):
            out = out + jnp.einsum('bcthw,co->bothw', hp[:, :, k:k + T], w[k])
        return out + b[None, :, None, None, None]

    res = (jnp.einsum('bcthw,co->bothw', x, p['wres'])
           + p['bres'][None, :, None, None, None])
    h = conv_t3(x, p['w1'], p['b1'])
    h = jnp.maximum(h * p['s1'][None, :, None, None, None]
                    + p['o1'][None, :, None, None, None], 0.0)
    h = conv_t3(h, p['w2'], p['b2'])
    h = jnp.maximum(h * p['s2'][None, :, None, None, None]
                    + p['o2'][None, :, None, None, None], 0.0)
    h = h + res
    pooled = h.mean(axis=(3, 4))                 # [B, hidden, T]
    y = jnp.transpose(pooled, (0, 2, 1))         # [B, T, hidden]
    y = jnp.maximum(y @ p['fc1w'] + p['fc1b'], 0.0)
    y = y @ p['fc2w'] + p['fc2b']
    return y


# ---------------------------------------------------------------------------
def make_params(key, C, Hd, NC):
    ks = jax.random.split(key, 20)
    n = lambda k, s, sc=0.1: sc * jax.random.normal(k, s, jnp.float32)
    eps = 1e-5

    w1, b1 = n(ks[0], (3, C, Hd)), n(ks[1], (Hd,))
    w2, b2 = n(ks[2], (3, Hd, Hd)), n(ks[3], (Hd,))
    wres, bres = n(ks[4], (C, Hd)), n(ks[5], (Hd,))
    fc1w, fc1b = n(ks[6], (Hd, 128)), n(ks[7], (128,))
    fc2w, fc2b = n(ks[8], (128, NC)), n(ks[9], (NC,))

    # BatchNorm3d (eval mode) folded into per-channel scale / offset.
    g1, be1 = 1.0 + n(ks[10], (Hd,)), n(ks[11], (Hd,))
    m1, v1 = n(ks[12], (Hd,)), 1.0 + 0.1 * jax.nn.softplus(jax.random.normal(ks[13], (Hd,)))
    g2, be2 = 1.0 + n(ks[14], (Hd,)), n(ks[15], (Hd,))
    m2, v2 = n(ks[16], (Hd,)), 1.0 + 0.1 * jax.nn.softplus(jax.random.normal(ks[17], (Hd,)))
    s1 = g1 / jnp.sqrt(v1 + eps)
    o1 = be1 - m1 * s1
    s2 = g2 / jnp.sqrt(v2 + eps)
    o2 = be2 - m2 * s2

    return dict(w1=w1, b1=b1, w2=w2, b2=b2, wres=wres, bres=bres,
                fc1w=fc1w, fc1b=fc1b, fc2w=fc2w, fc2b=fc2b,
                s1=s1, o1=o1, s2=s2, o2=o2)


if __name__ == "__main__":
    B, C, T, H, W = 2, 4, 8, 4, 4     # S = H*W = 16 -> grid (2 batch, 2 spatial)
    Hd, NC = 32, 1

    key = jax.random.PRNGKey(0)
    kx, kp = jax.random.split(key)
    x = jax.random.normal(kx, (B, C, T, H, W), jnp.float32)
    params = make_params(kp, C, Hd, NC)

    out = highlight_detection_head(x, params)
    out = jax.block_until_ready(out)

    ref = reference_forward(x, params)
    # bf16 matmul operands (f32 accumulation) -> bf16-appropriate tolerance.
    np.testing.assert_allclose(np.asarray(out), np.asarray(ref),
                               rtol=2e-2, atol=2e-2)
    assert out.shape == (B, T, NC)
    print("KERNEL_OK")
</pallas_src>

<mosaic_0001>
module attributes {stable_mosaic.version = 11 : i64} {
  func.func @_highlight_kernel(%arg0: i32, %arg1: i32, %arg2: memref<1x8x8x4xbf16, #tpu.memory_space<vmem>>, %arg3: memref<4x128xbf16, #tpu.memory_space<vmem>>, %arg4: memref<3x4x128xbf16, #tpu.memory_space<vmem>>, %arg5: memref<3x128x128xbf16, #tpu.memory_space<vmem>>, %arg6: memref<128x128xbf16, #tpu.memory_space<vmem>>, %arg7: memref<128x128xbf16, #tpu.memory_space<vmem>>, %arg8: memref<3x128xf32, #tpu.memory_space<vmem>>, %arg9: memref<2x128xf32, #tpu.memory_space<vmem>>, %arg10: memref<1x8x128xf32, #tpu.memory_space<vmem>>, %arg11: memref<8x128xf32, #tpu.memory_space<vmem>>) attributes {dimension_semantics = [#tpu.dimension_semantics<parallel>, #tpu.dimension_semantics<arbitrary>], iteration_bounds = array<i64: 2, 2>, scalar_prefetch = 0 : i64, scratch_operands = 1 : i64, tpu.core_type = #tpu.core_type<tc>, window_params = [{transform_indices = @transform_0, window_bounds = array<i64: 1, 8, 8, 4>}, {pipeline_mode = #tpu.pipeline_mode<synchronous>, transform_indices = @transform_1, window_bounds = array<i64: 4, 128>}, {pipeline_mode = #tpu.pipeline_mode<synchronous>, transform_indices = @transform_2, window_bounds = array<i64: 3, 4, 128>}, {pipeline_mode = #tpu.pipeline_mode<synchronous>, transform_indices = @transform_3, window_bounds = array<i64: 3, 128, 128>}, {pipeline_mode = #tpu.pipeline_mode<synchronous>, transform_indices = @transform_4, window_bounds = array<i64: 128, 128>}, {pipeline_mode = #tpu.pipeline_mode<synchronous>, transform_indices = @transform_5, window_bounds = array<i64: 128, 128>}, {pipeline_mode = #tpu.pipeline_mode<synchronous>, transform_indices = @transform_6, window_bounds = array<i64: 3, 128>}, {pipeline_mode = #tpu.pipeline_mode<synchronous>, transform_indices = @transform_7, window_bounds = array<i64: 2, 128>}, {transform_indices = @transform_8, window_bounds = array<i64: 1, 8, 128>}]} {
    %c0 = arith.constant 0 : index
    %c0_0 = arith.constant 0 : index
    %c0_1 = arith.constant 0 : index
    %c0_2 = arith.constant 0 : index
    %0 = vector.load %arg2[%c0, %c0_0, %c0_1, %c0_2] : memref<1x8x8x4xbf16, #tpu.memory_space<vmem>>, vector<1x8x8x4xbf16>
    %c0_3 = arith.constant 0 : index
    %c0_4 = arith.constant 0 : index
    %1 = vector.load %arg8[%c0_3, %c0_4] : memref<3x128xf32, #tpu.memory_space<vmem>>, vector<1x128xf32>
    %c1 = arith.constant 1 : index
    %c0_5 = arith.constant 0 : index
    %2 = vector.load %arg8[%c1, %c0_5] : memref<3x128xf32, #tpu.memory_space<vmem>>, vector<1x128xf32>
    %c2 = arith.constant 2 : index
    %c0_6 = arith.constant 0 : index
    %3 = vector.load %arg8[%c2, %c0_6] : memref<3x128xf32, #tpu.memory_space<vmem>>, vector<1x128xf32>
    %4 = vector.shape_cast %0 : vector<1x8x8x4xbf16> to vector<64x4xbf16>
    %c0_7 = arith.constant 0 : index
    %c0_8 = arith.constant 0 : index
    %5 = vector.load %arg3[%c0_7, %c0_8] : memref<4x128xbf16, #tpu.memory_space<vmem>>, vector<4x128xbf16>
    %cst = arith.constant dense<0.000000e+00> : vector<64x128xf32>
    %6 = tpu.matmul %4, %5, %cst {dimension_numbers = #tpu.dot_dimension_numbers<[1], [0], [0], [1], [0, 0, 1, 1], [], []>} : vector<64x4xbf16>, vector<4x128xbf16>, vector<64x128xf32> -> vector<64x128xf32>
    %7 = vector.broadcast %1 : vector<1x128xf32> to vector<64x128xf32>
    %8 = arith.addf %6, %7 : vector<64x128xf32>
    %cst_9 = arith.constant 0.000000e+00 : bf16
    %9 = vector.broadcast %cst_9 : bf16 to vector<1x1x8x4xbf16>
    %10 = vector.extract_strided_slice %0 {offsets = [0, 0, 0, 0], sizes = [1, 7, 8, 4], strides = [1, 1, 1, 1]} : vector<1x8x8x4xbf16> to vector<1x7x8x4xbf16>
    %11 = tpu.concatenate %9, %10 in 1 : vector<1x1x8x4xbf16>, vector<1x7x8x4xbf16> -> vector<1x8x8x4xbf16>
    %12 = vector.shape_cast %11 : vector<1x8x8x4xbf16> to vector<64x4xbf16>
    %13 = vector.extract_strided_slice %0 {offsets = [0, 1, 0, 0], sizes = [1, 7, 8, 4], strides = [1, 1, 1, 1]} : vector<1x8x8x4xbf16> to vector<1x7x8x4xbf16>
    %14 = tpu.concatenate %13, %9 in 1 : vector<1x7x8x4xbf16>, vector<1x1x8x4xbf16> -> vector<1x8x8x4xbf16>
    %15 = vector.shape_cast %14 : vector<1x8x8x4xbf16> to vector<64x4xbf16>
    %c0_10 = arith.constant 0 : index
    %c0_11 = arith.constant 0 : index
    %c0_12 = arith.constant 0 : index
    %16 = vector.load %arg4[%c0_10, %c0_11, %c0_12] : memref<3x4x128xbf16, #tpu.memory_space<vmem>>, vector<1x4x128xbf16>
    %17 = vector.shape_cast %16 : vector<1x4x128xbf16> to vector<4x128xbf16>
    %cst_13 = arith.constant dense<0.000000e+00> : vector<64x128xf32>
    %18 = tpu.matmul %12, %17, %cst_13 {dimension_numbers = #tpu.dot_dimension_numbers<[1], [0], [0], [1], [0, 0, 1, 1], [], []>} : vector<64x4xbf16>, vector<4x128xbf16>, vector<64x128xf32> -> vector<64x128xf32>
    %19 = vector.shape_cast %0 : vector<1x8x8x4xbf16> to vector<64x4xbf16>
    %c1_14 = arith.constant 1 : index
    %c0_15 = arith.constant 0 : index
    %c0_16 = arith.constant 0 : index
    %20 = vector.load %arg4[%c1_14, %c0_15, %c0_16] : memref<3x4x128xbf16, #tpu.memory_space<vmem>>, vector<1x4x128xbf16>
    %21 = vector.shape_cast %20 : vector<1x4x128xbf16> to vector<4x128xbf16>
    %cst_17 = arith.constant dense<0.000000e+00> : vector<64x128xf32>
    %22 = tpu.matmul %19, %21, %cst_17 {dimension_numbers = #tpu.dot_dimension_numbers<[1], [0], [0], [1], [0, 0, 1, 1], [], []>} : vector<64x4xbf16>, vector<4x128xbf16>, vector<64x128xf32> -> vector<64x128xf32>
    %23 = arith.addf %18, %22 : vector<64x128xf32>
    %c2_18 = arith.constant 2 : index
    %c0_19 = arith.constant 0 : index
    %c0_20 = arith.constant 0 : index
    %24 = vector.load %arg4[%c2_18, %c0_19, %c0_20] : memref<3x4x128xbf16, #tpu.memory_space<vmem>>, vector<1x4x128xbf16>
    %25 = vector.shape_cast %24 : vector<1x4x128xbf16> to vector<4x128xbf16>
    %cst_21 = arith.constant dense<0.000000e+00> : vector<64x128xf32>
    %26 = tpu.matmul %15, %25, %cst_21 {dimension_numbers = #tpu.dot_dimension_numbers<[1], [0], [0], [1], [0, 0, 1, 1], [], []>} : vector<64x4xbf16>, vector<4x128xbf16>, vector<64x128xf32> -> vector<64x128xf32>
    %27 = arith.addf %23, %26 : vector<64x128xf32>
    %28 = vector.broadcast %2 : vector<1x128xf32> to vector<64x128xf32>
    %29 = arith.addf %27, %28 : vector<64x128xf32>
    %cst_22 = arith.constant 0.000000e+00 : f32
    %30 = vector.broadcast %cst_22 : f32 to vector<64x128xf32>
    %31 = arith.maximumf %29, %30 : vector<64x128xf32>
    %32 = arith.truncf %31 : vector<64x128xf32> to vector<64x128xbf16>
    %33 = vector.shape_cast %32 : vector<64x128xbf16> to vector<1x8x8x128xbf16>
    %cst_23 = arith.constant 0.000000e+00 : bf16
    %34 = vector.broadcast %cst_23 : bf16 to vector<1x1x8x128xbf16>
    %35 = vector.extract_strided_slice %33 {offsets = [0, 0, 0, 0], sizes = [1, 7, 8, 128], strides = [1, 1, 1, 1]} : vector<1x8x8x128xbf16> to vector<1x7x8x128xbf16>
    %36 = tpu.concatenate %34, %35 in 1 : vector<1x1x8x128xbf16>, vector<1x7x8x128xbf16> -> vector<1x8x8x128xbf16>
    %37 = vector.shape_cast %36 : vector<1x8x8x128xbf16> to vector<64x128xbf16>
    %38 = vector.extract_strided_slice %33 {offsets = [0, 1, 0, 0], sizes = [1, 7, 8, 128], strides = [1, 1, 1, 1]} : vector<1x8x8x128xbf16> to vector<1x7x8x128xbf16>
    %39 = tpu.concatenate %38, %34 in 1 : vector<1x7x8x128xbf16>, vector<1x1x8x128xbf16> -> vector<1x8x8x128xbf16>
    %40 = vector.shape_cast %39 : vector<1x8x8x128xbf16> to vector<64x128xbf16>
    %c0_24 = arith.constant 0 : index
    %c0_25 = arith.constant 0 : index
    %c0_26 = arith.constant 0 : index
    %41 = vector.load %arg5[%c0_24, %c0_25, %c0_26] : memref<3x128x128xbf16, #tpu.memory_space<vmem>>, vector<1x128x128xbf16>
    %42 = vector.shape_cast %41 : vector<1x128x128xbf16> to vector<128x128xbf16>
    %cst_27 = arith.constant dense<0.000000e+00> : vector<64x128xf32>
    %43 = tpu.matmul %37, %42, %cst_27 {dimension_numbers = #tpu.dot_dimension_numbers<[1], [0], [0], [1], [0, 0, 1, 1], [], []>} : vector<64x128xbf16>, vector<128x128xbf16>, vector<64x128xf32> -> vector<64x128xf32>
    %44 = vector.shape_cast %33 : vector<1x8x8x128xbf16> to vector<64x128xbf16>
    %c1_28 = arith.constant 1 : index
    %c0_29 = arith.constant 0 : index
    %c0_30 = arith.constant 0 : index
    %45 = vector.load %arg5[%c1_28, %c0_29, %c0_30] : memref<3x128x128xbf16, #tpu.memory_space<vmem>>, vector<1x128x128xbf16>
    %46 = vector.shape_cast %45 : vector<1x128x128xbf16> to vector<128x128xbf16>
    %cst_31 = arith.constant dense<0.000000e+00> : vector<64x128xf32>
    %47 = tpu.matmul %44, %46, %cst_31 {dimension_numbers = #tpu.dot_dimension_numbers<[1], [0], [0], [1], [0, 0, 1, 1], [], []>} : vector<64x128xbf16>, vector<128x128xbf16>, vector<64x128xf32> -> vector<64x128xf32>
    %48 = arith.addf %43, %47 : vector<64x128xf32>
    %c2_32 = arith.constant 2 : index
    %c0_33 = arith.constant 0 : index
    %c0_34 = arith.constant 0 : index
    %49 = vector.load %arg5[%c2_32, %c0_33, %c0_34] : memref<3x128x128xbf16, #tpu.memory_space<vmem>>, vector<1x128x128xbf16>
    %50 = vector.shape_cast %49 : vector<1x128x128xbf16> to vector<128x128xbf16>
    %cst_35 = arith.constant dense<0.000000e+00> : vector<64x128xf32>
    %51 = tpu.matmul %40, %50, %cst_35 {dimension_numbers = #tpu.dot_dimension_numbers<[1], [0], [0], [1], [0, 0, 1, 1], [], []>} : vector<64x128xbf16>, vector<128x128xbf16>, vector<64x128xf32> -> vector<64x128xf32>
    %52 = arith.addf %48, %51 : vector<64x128xf32>
    %53 = vector.broadcast %3 : vector<1x128xf32> to vector<64x128xf32>
    %54 = arith.addf %52, %53 : vector<64x128xf32>
    %cst_36 = arith.constant 0.000000e+00 : f32
    %55 = vector.broadcast %cst_36 : f32 to vector<64x128xf32>
    %56 = arith.maximumf %54, %55 : vector<64x128xf32>
    %57 = arith.addf %56, %8 : vector<64x128xf32>
    %58 = vector.shape_cast %57 : vector<64x128xf32> to vector<8x8x128xf32>
    %cst_37 = arith.constant dense<0.000000e+00> : vector<8x128xf32>
    %59 = vector.multi_reduction <add>, %58, %cst_37 [1] : vector<8x8x128xf32> to vector<8x128xf32>
    %c0_i32 = arith.constant 0 : i32
    %60 = arith.cmpi eq, %arg1, %c0_i32 : i32
    %61 = arith.extui %60 : i1 to i32
    %c0_i32_38 = arith.constant 0 : i32
    %62 = arith.cmpi ne, %61, %c0_i32_38 : i32
    scf.if %62 {
      %cst_44 = arith.constant 0.000000e+00 : f32
      %69 = vector.broadcast %cst_44 : f32 to vector<8x128xf32>
      %c0_45 = arith.constant 0 : index
      %c0_46 = arith.constant 0 : index
      %70 = vector.load %arg11[%c0_45, %c0_46] : memref<8x128xf32, #tpu.memory_space<vmem>>, vector<8x128xf32>
      tpu.vector_store %arg11[%c0_45, %c0_46], %69 {strides = array<i32>} : memref<8x128xf32, #tpu.memory_space<vmem>>, vector<8x128xf32>,
    } else {
    }
    %c0_39 = arith.constant 0 : index
    %c0_40 = arith.constant 0 : index
    %63 = vector.load %arg11[%c0_39, %c0_40] : memref<8x128xf32, #tpu.memory_space<vmem>>, vector<8x128xf32>
    %64 = arith.addf %63, %59 : vector<8x128xf32>
    %c0_41 = arith.constant 0 : index
    %c0_42 = arith.constant 0 : index
    %65 = vector.load %arg11[%c0_41, %c0_42] : memref<8x128xf32, #tpu.memory_space<vmem>>, vector<8x128xf32>
    tpu.vector_store %arg11[%c0_41, %c0_42], %64 {strides = array<i32>} : memref<8x128xf32, #tpu.memory_space<vmem>>, vector<8x128xf32>,
    %c1_i32 = arith.constant 1 : i32
    %66 = arith.cmpi eq, %arg1, %c1_i32 : i32
    %67 = arith.extui %66 : i1 to i32
    %c0_i32_43 = arith.constant 0 : i32
    %68 = arith.cmpi ne, %67, %c0_i32_43 : i32
    scf.if %68 {
      %c0_44 = arith.constant 0 : index
      %c0_45 = arith.constant 0 : index
      %69 = vector.load %arg9[%c0_44, %c0_45] : memref<2x128xf32, #tpu.memory_space<vmem>>, vector<1x128xf32>
      %c1_46 = arith.constant 1 : index
      %c0_47 = arith.constant 0 : index
      %70 = vector.load %arg9[%c1_46, %c0_47] : memref<2x128xf32, #tpu.memory_space<vmem>>, vector<1x128xf32>
      %c0_48 = arith.constant 0 : index
      %c0_49 = arith.constant 0 : index
      %71 = vector.load %arg11[%c0_48, %c0_49] : memref<8x128xf32, #tpu.memory_space<vmem>>, vector<8x128xf32>
      %72 = arith.truncf %71 : vector<8x128xf32> to vector<8x128xbf16>
      %c0_50 = arith.constant 0 : index
      %c0_51 = arith.constant 0 : index
      %73 = vector.load %arg6[%c0_50, %c0_51] : memref<128x128xbf16, #tpu.memory_space<vmem>>, vector<128x128xbf16>
      %cst_52 = arith.constant dense<0.000000e+00> : vector<8x128xf32>
      %74 = tpu.matmul %72, %73, %cst_52 {dimension_numbers = #tpu.dot_dimension_numbers<[1], [0], [0], [1], [0, 0, 1, 1], [], []>} : vector<8x128xbf16>, vector<128x128xbf16>, vector<8x128xf32> -> vector<8x128xf32>
      %75 = vector.broadcast %69 : vector<1x128xf32> to vector<8x128xf32>
      %76 = arith.addf %74, %75 : vector<8x128xf32>
      %cst_53 = arith.constant 0.000000e+00 : f32
      %77 = vector.broadcast %cst_53 : f32 to vector<8x128xf32>
      %78 = arith.maximumf %76, %77 : vector<8x128xf32>
      %79 = arith.truncf %78 : vector<8x128xf32> to vector<8x128xbf16>
      %c0_54 = arith.constant 0 : index
      %c0_55 = arith.constant 0 : index
      %80 = vector.load %arg7[%c0_54, %c0_55] : memref<128x128xbf16, #tpu.memory_space<vmem>>, vector<128x128xbf16>
      %cst_56 = arith.constant dense<0.000000e+00> : vector<8x128xf32>
      %81 = tpu.matmul %79, %80, %cst_56 {dimension_numbers = #tpu.dot_dimension_numbers<[1], [0], [0], [1], [0, 0, 1, 1], [], []>} : vector<8x128xbf16>, vector<128x128xbf16>, vector<8x128xf32> -> vector<8x128xf32>
      %82 = vector.broadcast %70 : vector<1x128xf32> to vector<8x128xf32>
      %83 = arith.addf %81, %82 : vector<8x128xf32>
      %84 = vector.shape_cast %83 : vector<8x128xf32> to vector<1x8x128xf32>
      %c0_57 = arith.constant 0 : index
      %c0_58 = arith.constant 0 : index
      %c0_59 = arith.constant 0 : index
      %85 = vector.load %arg10[%c0_57, %c0_58, %c0_59] : memref<1x8x128xf32, #tpu.memory_space<vmem>>, vector<1x8x128xf32>
      tpu.vector_store %arg10[%c0_57, %c0_58, %c0_59], %84 {strides = array<i32>} : memref<1x8x128xf32, #tpu.memory_space<vmem>>, vector<1x8x128xf32>,
    } else {
    }
    return
  }
  func.func @transform_0(%arg0: i32, %arg1: i32) -> (i32, i32, i32, i32) {
    %c0_i32 = arith.constant 0 : i32
    %c0_i32_0 = arith.constant 0 : i32
    %c0_i32_1 = arith.constant 0 : i32
    return %arg0, %c0_i32, %arg1, %c0_i32_0 : i32, i32, i32, i32
  }
  func.func @transform_1(%arg0: i32, %arg1: i32) -> (i32, i32) {
    %c0_i32 = arith.constant 0 : i32
    %c0_i32_0 = arith.constant 0 : i32
    %c0_i32_1 = arith.constant 0 : i32
    return %c0_i32, %c0_i32_0 : i32, i32
  }
  func.func @transform_2(%arg0: i32, %arg1: i32) -> (i32, i32, i32) {
    %c0_i32 = arith.constant 0 : i32
    %c0_i32_0 = arith.constant 0 : i32
    %c0_i32_1 = arith.constant 0 : i32
    %c0_i32_2 = arith.constant 0 : i32
    return %c0_i32, %c0_i32_0, %c0_i32_1 : i32, i32, i32
  }
  func.func @transform_3(%arg0: i32, %arg1: i32) -> (i32, i32, i32) {
    %c0_i32 = arith.constant 0 : i32
    %c0_i32_0 = arith.constant 0 : i32
    %c0_i32_1 = arith.constant 0 : i32
    %c0_i32_2 = arith.constant 0 : i32
    return %c0_i32, %c0_i32_0, %c0_i32_1 : i32, i32, i32
  }
  func.func @transform_4(%arg0: i32, %arg1: i32) -> (i32, i32) {
    %c0_i32 = arith.constant 0 : i32
    %c0_i32_0 = arith.constant 0 : i32
    %c0_i32_1 = arith.constant 0 : i32
    return %c0_i32, %c0_i32_0 : i32, i32
  }
  func.func @transform_5(%arg0: i32, %arg1: i32) -> (i32, i32) {
    %c0_i32 = arith.constant 0 : i32
    %c0_i32_0 = arith.constant 0 : i32
    %c0_i32_1 = arith.constant 0 : i32
    return %c0_i32, %c0_i32_0 : i32, i32
  }
  func.func @transform_6(%arg0: i32, %arg1: i32) -> (i32, i32) {
    %c0_i32 = arith.constant 0 : i32
    %c0_i32_0 = arith.constant 0 : i32
    %c0_i32_1 = arith.constant 0 : i32
    return %c0_i32, %c0_i32_0 : i32, i32
  }
  func.func @transform_7(%arg0: i32, %arg1: i32) -> (i32, i32) {
    %c0_i32 = arith.constant 0 : i32
    %c0_i32_0 = arith.constant 0 : i32
    %c0_i32_1 = arith.constant 0 : i32
    return %c0_i32, %c0_i32_0 : i32, i32
  }
  func.func @transform_8(%arg0: i32, %arg1: i32) -> (i32, i32, i32) {
    %c0_i32 = arith.constant 0 : i32
    %c0_i32_0 = arith.constant 0 : i32
    %c0_i32_1 = arith.constant 0 : i32
    return %arg0, %c0_i32, %c0_i32_0 : i32, i32, i32
  }
}

</mosaic_0001>

<llo_original>
// kernel: tpu_custom_call.1
$region0: #{tpu_custom_call.1}
  #allocation0 [shape = 'u32[]', space=smem, size = 0x4, offset = 0x4, fixed_abs, tag = 'smem constant byte address 0x4 - core index']
  #allocation1 [shape = 'u32[144,128]{1,0:T(1,128)}', space=vmem, size = 0x12000, scoped, tag = 'internal scratch']
  #allocation2 [shape = 'f32[8,128]{1,0:T(8,128)}', space=vmem, size = 0x1000, scoped, tag = 'scratch operand']
  %s0 = inlined_call_operand.vmem [shape: bf16[2,8,16,4], index: 0, kind: input, shape index: {}]
  %s1 = inlined_call_operand.vmem [shape: bf16[4,128], index: 1, kind: input, shape index: {}]
  %s2 = inlined_call_operand.vmem [shape: bf16[3,4,128], index: 2, kind: input, shape index: {}]
  %s3 = inlined_call_operand.hbm [shape: bf16[3,128,128], index: 3, kind: input, shape index: {}]
  %s4 = inlined_call_operand.vmem [shape: bf16[128,128], index: 4, kind: input, shape index: {}]
  %s5 = inlined_call_operand.vmem [shape: bf16[128,128], index: 5, kind: input, shape index: {}]
  %s6 = inlined_call_operand.vmem [shape: f32[3,128], index: 6, kind: input, shape index: {}]
  %s7 = inlined_call_operand.vmem [shape: f32[2,128], index: 7, kind: input, shape index: {}]
  %s8 = inlined_call_operand.hbm [shape: f32[2,8,128], index: 8, kind: output, shape index: {}]
  %s9 = sld [smem:[#allocation0]]
  $region118: #{tpu_custom_call.1} parent=0
    _
  %s11 = ssub.s32 1, %s9
  %s12 = scalar_select 0, %s11, %s9
  $region1: #{tpu_custom_call.1} parent=0
    #allocation3 [shape = 'u8[32768]{0}', space=vmem, size = 0x8000, scoped, tag = 'input window, operand 0']
    #allocation4 [shape = 'u8[98304]{0}', space=vmem, size = 0x18000, scoped, tag = 'input window, operand 3, single buffered']
    #allocation5 [shape = 's32[2]{0}', space=sflag, size = 0x8, scoped, tag = 'scoped memory for tpu_custom_call.1']
    #allocation6 [shape = 's32[2]{0}', space=sflag, size = 0x8, scoped, tag = 'scoped memory for tpu_custom_call.1']
    #allocation7 [shape = 'u8[8192]{0}', space=vmem, size = 0x2000, scoped, tag = 'output window, operand 0']
    %13 = vsyncpa [#allocation5], 0
    %14 = vsyncpa [#allocation6], 0
    %s15 = scalar_lea.sflag [#allocation6], 1
    %16 = vsyncpa %s15, 0
    loop: start=0, step=1, limit=6
    $region2: #{tpu_custom_call.1} parent=1 // loop_pre_header
      _
    $region3: #{tpu_custom_call.1} parent=1 // loop_header
      %s18 = sphi 0, %s22
      %p19 = scmp.ge.s32.totalorder %s18, 6
      %s25 = sphi 0, %s37
      %s26 = sphi 0, %s33
      %s27 = sphi 0, %s25
      %s28 = sphi 0, %s26
      %s29 = sphi 0, %s27
      %s30 = sphi 0, %s28
      %s42 = sphi 0, %s44
      %s45 = sphi 0, %s42
      %s46 = sphi 0, %s45
      %s62 = sphi 0, %s46
      %s66 = sphi 0, %s66
      %s68 = sphi 0, %s66
      %s69 = sphi 0, %s68
      %s83 = sphi 0, %s69
      %s87 = sphi 0, %s87
      %s89 = sphi 0, %s87
      %s90 = sphi 0, %s89
      %s104 = sphi 0, %s90
      %s108 = sphi 0, %s108
      %s110 = sphi 0, %s108
      %s111 = sphi 0, %s110
      %s125 = sphi 0, %s111
      %s129 = sphi 0, %s129
      %s131 = sphi 0, %s129
      %s132 = sphi 0, %s131
      %s146 = sphi 0, %s132
      %s150 = sphi 0, %s150
      %s152 = sphi 0, %s150
      %s153 = sphi 0, %s152
      %s167 = sphi 0, %s153
      %s171 = sphi 0, %s171
      %s173 = sphi 0, %s171
      %s174 = sphi 0, %s173
      %s188 = sphi 0, %s174
      %s192 = sphi 0, %s192
      %s194 = sphi 0, %s192
      %s195 = sphi 0, %s194
      %s209 = sphi 0, %s195
      %s215 = sphi 0, %s217
      %s218 = sphi 0, %s215
      %s219 = sphi 0, %s218
      %s235 = sphi 0, %s219
    $region4: #{tpu_custom_call.1} parent=1 // loop_header_branch
      %21 = sbr.rel (%p19) target = $region8
    $region5: #{tpu_custom_call.1} parent=1 // loop_body
      %s23 = ssub.s32 %s18, 1
      %s24 = ssub.s32 %s18, 2
      %s31 = sadd.s32 1, %s26
      %p32 = scmp.ge.s32.totalorder %s31, 2
      %s33 = scalar_select %p32, 0, %s31
      %s34 = sadd.s32 1, %s25
      %s35 = scalar_select %p32, %s34, %s25
      %p36 = scmp.ge.s32.totalorder %s35, 2
      %s37 = scalar_select %p36, 0, %s35
      %s38 = ssub.s32 %s25, %s37
      %s39 = ssub.s32 %s26, %s33
      %s40 = sor.u32 %s38, %s39
      %p41 = scmp.eq.s32.totalorder %s40, 0
      %s43 = sadd.s32 %s42, 1
      %s44 = scalar_select %p41, %s42, %s43
      %p47 = pneg %p41
      %p48 = scmp.eq.s32.totalorder %s18, 3
      %p49 = por %p47, %p48
      %p50 = scmp.ne.s32.totalorder %s42, %s45
      %p51 = scmp.eq.s32.totalorder %s18, 0
      %p52 = por %p50, %p51
      %p53 = scmp.ne.s32.totalorder %s42, %s45
      %p54 = scmp.eq.s32.totalorder %s23, 3
      %p55 = por %p53, %p54
      %p56 = scmp.ne.s32.totalorder %s45, %s46
      %p57 = scmp.eq.s32.totalorder %s23, 0
      %p58 = por %p56, %p57
      %p59 = scmp.ne.s32.totalorder %s45, %s46
      %p60 = scmp.eq.s32.totalorder %s24, 3
      %p61 = por %p59, %p60
      %p63 = scmp.ne.s32.totalorder %s46, %s62
      %p64 = scmp.eq.s32.totalorder %s24, 0
      %p65 = por %p63, %p64
      %s67 = sadd.s32 %s66, 1
      %p70 = scmp.eq.s32.totalorder %s18, 3
      %p71 = scmp.ne.s32.totalorder %s66, %s68
      %p72 = scmp.eq.s32.totalorder %s18, 0
      %p73 = por %p71, %p72
      %p74 = scmp.ne.s32.totalorder %s66, %s68
      %p75 = scmp.eq.s32.totalorder %s23, 3
      %p76 = por %p74, %p75
      %p77 = scmp.ne.s32.totalorder %s68, %s69
      %p78 = scmp.eq.s32.totalorder %s23, 0
      %p79 = por %p77, %p78
      %p80 = scmp.ne.s32.totalorder %s68, %s69
      %p81 = scmp.eq.s32.totalorder %s24, 3
      %p82 = por %p80, %p81
      %p84 = scmp.ne.s32.totalorder %s69, %s83
      %p85 = scmp.eq.s32.totalorder %s24, 0
      %p86 = por %p84, %p85
      %s88 = sadd.s32 %s87, 1
      %p91 = scmp.eq.s32.totalorder %s18, 3
      %p92 = scmp.ne.s32.totalorder %s87, %s89
      %p93 = scmp.eq.s32.totalorder %s18, 0
      %p94 = por %p92, %p93
      %p95 = scmp.ne.s32.totalorder %s87, %s89
      %p96 = scmp.eq.s32.totalorder %s23, 3
      %p97 = por %p95, %p96
      %p98 = scmp.ne.s32.totalorder %s89, %s90
      %p99 = scmp.eq.s32.totalorder %s23, 0
      %p100 = por %p98, %p99
      %p101 = scmp.ne.s32.totalorder %s89, %s90
      %p102 = scmp.eq.s32.totalorder %s24, 3
      %p103 = por %p101, %p102
      %p105 = scmp.ne.s32.totalorder %s90, %s104
      %p106 = scmp.eq.s32.totalorder %s24, 0
      %p107 = por %p105, %p106
      %s109 = sadd.s32 %s108, 1
      %p112 = scmp.eq.s32.totalorder %s18, 3
      %p113 = scmp.ne.s32.totalorder %s108, %s110
      %p114 = scmp.eq.s32.totalorder %s18, 0
      %p115 = por %p113, %p114
      %p116 = scmp.ne.s32.totalorder %s108, %s110
      %p117 = scmp.eq.s32.totalorder %s23, 3
      %p118 = por %p116, %p117
      %p119 = scmp.ne.s32.totalorder %s110, %s111
      %p120 = scmp.eq.s32.totalorder %s23, 0
      %p121 = por %p119, %p120
      %p122 = scmp.ne.s32.totalorder %s110, %s111
      %p123 = scmp.eq.s32.totalorder %s24, 3
      %p124 = por %p122, %p123
      %p126 = scmp.ne.s32.totalorder %s111, %s125
      %p127 = scmp.eq.s32.totalorder %s24, 0
      %p128 = por %p126, %p127
      %s130 = sadd.s32 %s129, 1
      %p133 = scmp.eq.s32.totalorder %s18, 3
      %p134 = scmp.ne.s32.totalorder %s129, %s131
      %p135 = scmp.eq.s32.totalorder %s18, 0
      %p136 = por %p134, %p135
      %p137 = scmp.ne.s32.totalorder %s129, %s131
      %p138 = scmp.eq.s32.totalorder %s23, 3
      %p139 = por %p137, %p138
      %p140 = scmp.ne.s32.totalorder %s131, %s132
      %p141 = scmp.eq.s32.totalorder %s23, 0
      %p142 = por %p140, %p141
      %p143 = scmp.ne.s32.totalorder %s131, %s132
      %p144 = scmp.eq.s32.totalorder %s24, 3
      %p145 = por %p143, %p144
      %p147 = scmp.ne.s32.totalorder %s132, %s146
      %p148 = scmp.eq.s32.totalorder %s24, 0
      %p149 = por %p147, %p148
      %s151 = sadd.s32 %s150, 1
      %p154 = scmp.eq.s32.totalorder %s18, 3
      %p155 = scmp.ne.s32.totalorder %s150, %s152
      %p156 = scmp.eq.s32.totalorder %s18, 0
      %p157 = por %p155, %p156
      %p158 = scmp.ne.s32.totalorder %s150, %s152
      %p159 = scmp.eq.s32.totalorder %s23, 3
      %p160 = por %p158, %p159
      %p161 = scmp.ne.s32.totalorder %s152, %s153
      %p162 = scmp.eq.s32.totalorder %s23, 0
      %p163 = por %p161, %p162
      %p164 = scmp.ne.s32.totalorder %s152, %s153
      %p165 = scmp.eq.s32.totalorder %s24, 3
      %p166 = por %p164, %p165
      %p168 = scmp.ne.s32.totalorder %s153, %s167
      %p169 = scmp.eq.s32.totalorder %s24, 0
      %p170 = por %p168, %p169
      %s172 = sadd.s32 %s171, 1
      %p175 = scmp.eq.s32.totalorder %s18, 3
      %p176 = scmp.ne.s32.totalorder %s171, %s173
      %p177 = scmp.eq.s32.totalorder %s18, 0
      %p178 = por %p176, %p177
      %p179 = scmp.ne.s32.totalorder %s171, %s173
      %p180 = scmp.eq.s32.totalorder %s23, 3
      %p181 = por %p179, %p180
      %p182 = scmp.ne.s32.totalorder %s173, %s174
      %p183 = scmp.eq.s32.totalorder %s23, 0
      %p184 = por %p182, %p183
      %p185 = scmp.ne.s32.totalorder %s173, %s174
      %p186 = scmp.eq.s32.totalorder %s24, 3
      %p187 = por %p185, %p186
      %p189 = scmp.ne.s32.totalorder %s174, %s188
      %p190 = scmp.eq.s32.totalorder %s24, 0
      %p191 = por %p189, %p190
      %s193 = sadd.s32 %s192, 1
      %p196 = scmp.eq.s32.totalorder %s18, 3
      %p197 = scmp.ne.s32.totalorder %s192, %s194
      %p198 = scmp.eq.s32.totalorder %s18, 0
      %p199 = por %p197, %p198
      %p200 = scmp.ne.s32.totalorder %s192, %s194
      %p201 = scmp.eq.s32.totalorder %s23, 3
      %p202 = por %p200, %p201
      %p203 = scmp.ne.s32.totalorder %s194, %s195
      %p204 = scmp.eq.s32.totalorder %s23, 0
      %p205 = por %p203, %p204
      %p206 = scmp.ne.s32.totalorder %s194, %s195
      %p207 = scmp.eq.s32.totalorder %s24, 3
      %p208 = por %p206, %p207
      %p210 = scmp.ne.s32.totalorder %s195, %s209
      %p211 = scmp.eq.s32.totalorder %s24, 0
      %p212 = por %p210, %p211
      %s213 = ssub.s32 %s25, %s37
      %p214 = scmp.eq.s32.totalorder %s213, 0
      %s216 = sadd.s32 %s215, 1
      %s217 = scalar_select %p214, %s215, %s216
      %p220 = pneg %p214
      %p221 = scmp.eq.s32.totalorder %s18, 3
      %p222 = por %p220, %p221
      %p223 = scmp.ne.s32.totalorder %s215, %s218
      %p224 = scmp.eq.s32.totalorder %s18, 0
      %p225 = por %p223, %p224
      %p226 = scmp.ne.s32.totalorder %s215, %s218
      %p227 = scmp.eq.s32.totalorder %s23, 3
      %p228 = por %p226, %p227
      %p229 = scmp.ne.s32.totalorder %s218, %s219
      %p230 = scmp.eq.s32.totalorder %s23, 0
      %p231 = por %p229, %p230
      %p232 = scmp.ne.s32.totalorder %s218, %s219
      %p233 = scmp.eq.s32.totalorder %s24, 3
      %p234 = por %p232, %p233
      %p236 = scmp.ne.s32.totalorder %s219, %s235
      %p237 = scmp.eq.s32.totalorder %s24, 0
      %p238 = por %p236, %p237
      %p239 = scmp.le.s32.totalorder 1, %s18
      %p240 = scmp.lt.s32.totalorder %s18, 5
      %p241 = pnand %p239, %p240
      %p242 = pneg %p241
      // Predicated region
      $region9: #{tpu_custom_call.1} parent=5 // pred_check
        _
      $region10: #{tpu_custom_call.1} parent=5 // pred_check_branch
        %244 = sbr.rel (%p241) target = $region12
      $region11: #{tpu_custom_call.1} parent=5 // pred_region
        %s245 = ssub.s32 %s18, 1
        // Predicated region
        $region13: #{tpu_custom_call.1} parent=11 // pred_check
          %p246 = pneg %p79
        $region14: #{tpu_custom_call.1} parent=11 // pred_check_branch
          %248 = sbr.rel (%p246) target = $region16
        $region15: #{tpu_custom_call.1} parent=11 // pred_region
          _
        $region16: #{tpu_custom_call.1} parent=11 // pred_fallthru
          _
        // Predicated region
        $region17: #{tpu_custom_call.1} parent=11 // pred_check
          %p249 = pneg %p100
        $region18: #{tpu_custom_call.1} parent=11 // pred_check_branch
          %251 = sbr.rel (%p249) target = $region20
        $region19: #{tpu_custom_call.1} parent=11 // pred_region
          _
        $region20: #{tpu_custom_call.1} parent=11 // pred_fallthru
          _
        // Predicated region
        $region21: #{tpu_custom_call.1} parent=11 // pred_check
          %p252 = pneg %p121
        $region22: #{tpu_custom_call.1} parent=11 // pred_check_branch
          %254 = sbr.rel (%p252) target = $region24
        $region23: #{tpu_custom_call.1} parent=11 // pred_region
          %s256 = ssub.s32 3072, 3072
          %257 = vsyncadd [#allocation5], %s256
          %s258 = sshll.u32 [#allocation4], 4
          %s259 = int_to_ptr.vmem [resolvable:$true] %s258
          %264 = dma.hbm_to_vmem [thread:$0]  %s3, 3072, %s259, [#allocation5], 64, 64, 4
        $region24: #{tpu_custom_call.1} parent=11 // pred_fallthru
          _
        // Predicated region
        $region25: #{tpu_custom_call.1} parent=11 // pred_check
          %p265 = pneg %p142
        $region26: #{tpu_custom_call.1} parent=11 // pred_check_branch
          %267 = sbr.rel (%p265) target = $region28
        $region27: #{tpu_custom_call.1} parent=11 // pred_region
          _
        $region28: #{tpu_custom_call.1} parent=11 // pred_fallthru
          _
        // Predicated region
        $region29: #{tpu_custom_call.1} parent=11 // pred_check
          %p268 = pneg %p163
        $region30: #{tpu_custom_call.1} parent=11 // pred_check_branch
          %270 = sbr.rel (%p268) target = $region32
        $region31: #{tpu_custom_call.1} parent=11 // pred_region
          _
        $region32: #{tpu_custom_call.1} parent=11 // pred_fallthru
          _
        // Predicated region
        $region33: #{tpu_custom_call.1} parent=11 // pred_check
          %p271 = pneg %p184
        $region34: #{tpu_custom_call.1} parent=11 // pred_check_branch
          %273 = sbr.rel (%p271) target = $region36
        $region35: #{tpu_custom_call.1} parent=11 // pred_region
          _
        $region36: #{tpu_custom_call.1} parent=11 // pred_fallthru
          _
        // Predicated region
        $region37: #{tpu_custom_call.1} parent=11 // pred_check
          %p274 = pneg %p205
        $region38: #{tpu_custom_call.1} parent=11 // pred_check_branch
          %276 = sbr.rel (%p274) target = $region40
        $region39: #{tpu_custom_call.1} parent=11 // pred_region
          _
        $region40: #{tpu_custom_call.1} parent=11 // pred_fallthru
          _
      $region12: #{tpu_custom_call.1} parent=5 // pred_fallthru
        _
      %p277 = scmp.lt.s32.totalorder %s18, 4
      // Predicated region
      $region41: #{tpu_custom_call.1} parent=5 // pred_check
        %p278 = pneg %p277
      $region42: #{tpu_custom_call.1} parent=5 // pred_check_branch
        %280 = sbr.rel (%p278) target = $region44
      $region43: #{tpu_custom_call.1} parent=5 // pred_region
        // Predicated region
        $region45: #{tpu_custom_call.1} parent=43 // pred_check
          %p281 = pneg %p52
        $region46: #{tpu_custom_call.1} parent=43 // pred_check_branch
          %283 = sbr.rel (%p281) target = $region48
        $region47: #{tpu_custom_call.1} parent=43 // pred_region
          %s284 = sand.u32 %s42, 1
          %s285 = sand.u32 %s42, 1
          %s286 = smul.addr %s285, 32
          %s287 = scalar_lea.vmem [#allocation3], %s286
          %s288 = smul.addr %s25, 16
          %s289 = sadd.s32 %s26, %s288
          %s290 = smul.addr %s289, 4
          %s291 = scalar_lea.vmem %s0, %s290
          // Predicated region
          $region49: #{tpu_custom_call.1} parent=47 // pred_check
            _
          $region50: #{tpu_custom_call.1} parent=47 // pred_check_branch
            %293 = sbr.rel (0) target = $region52
          $region51: #{tpu_custom_call.1} parent=47 // pred_region
            // Predicated region
            $region53: #{tpu_custom_call.1} parent=51 // pred_check
              _
            $region54: #{tpu_custom_call.1} parent=51 // pred_check_branch
              %295 = sbr.rel target = $region56
            $region55: #{tpu_custom_call.1} parent=51 // pred_region
              // Predicated region
              $region68: #{tpu_custom_call.1} parent=55 // pred_check
                _
              $region69: #{tpu_custom_call.1} parent=55 // pred_check_branch
                %324 = sbr.rel (0) target = $region71
              $region70: #{tpu_custom_call.1} parent=55 // pred_region
                loop: start=0, step=1, limit=1
                $region72: #{tpu_custom_call.1} parent=70 // loop_pre_header
                  _
                $region73: #{tpu_custom_call.1} parent=70 // loop_header
                  %s326 = sphi 0, %s330
                  %p327 = scmp.ge.s32.totalorder %s326, 1
                  %s331 = sphi %s291, %s291
                  %s332 = sphi %s287, %s287
                $region74: #{tpu_custom_call.1} parent=70 // loop_header_branch
                  %329 = sbr.rel (%p327) target = $region78
                $region75: #{tpu_custom_call.1} parent=70 // loop_body
                  _
                $region76: #{tpu_custom_call.1} parent=70 // loop_footer
                  %s330 = sadd.s32 1, %s326
                $region77: #{tpu_custom_call.1} parent=70 // loop_footer_branch
                  %325 = sbr.rel target = $region73
                $region78: #{tpu_custom_call.1} parent=70 // loop_exit
                  _
                loop: start=0, step=1, limit=1
                $region79: #{tpu_custom_call.1} parent=70 // loop_pre_header
                  _
                $region80: #{tpu_custom_call.1} parent=70 // loop_header
                  %s335 = sphi 0, %s339
                  %p336 = scmp.ge.s32.totalorder %s335, 1
                  %s340 = sphi %s291, %s291
                  %s341 = sphi %s287, %s287
                $region81: #{tpu_custom_call.1} parent=70 // loop_header_branch
                  %338 = sbr.rel (%p336) target = $region85
                $region82: #{tpu_custom_call.1} parent=70 // loop_body
                  %v342 = vld [vmem:[%s340] sm:$0xf]
                  %343 = vst [vmem:[%s341] sm:$0xf] %v342
                  %v344 = vld [vmem:[%s340 + $0x8] sm:$0xf]
                  %345 = vst [vmem:[%s341 + $0x4] sm:$0xf] %v344
                  %v346 = vld [vmem:[%s340 + $0x10] sm:$0xf]
                  %347 = vst [vmem:[%s341 + $0x8] sm:$0xf] %v346
                  %v348 = vld [vmem:[%s340 + $0x18] sm:$0xf]
                  %349 = vst [vmem:[%s341 + $0xc] sm:$0xf] %v348
                  %v350 = vld [vmem:[%s340 + $0x20] sm:$0xf]
                  %351 = vst [vmem:[%s341 + $0x10] sm:$0xf] %v350
                  %v352 = vld [vmem:[%s340 + $0x28] sm:$0xf]
                  %353 = vst [vmem:[%s341 + $0x14] sm:$0xf] %v352
                  %v354 = vld [vmem:[%s340 + $0x30] sm:$0xf]
                  %355 = vst [vmem:[%s341 + $0x18] sm:$0xf] %v354
                  %v356 = vld [vmem:[%s340 + $0x38] sm:$0xf]
                  %357 = vst [vmem:[%s341 + $0x1c] sm:$0xf] %v356
                $region83: #{tpu_custom_call.1} parent=70 // loop_footer
                  %s339 = sadd.s32 1, %s335
                $region84: #{tpu_custom_call.1} parent=70 // loop_footer_branch
                  %334 = sbr.rel target = $region80
                $region85: #{tpu_custom_call.1} parent=70 // loop_exit
                  _
              $region71: #{tpu_custom_call.1} parent=55 // pred_fallthru
                _
            $region56: #{tpu_custom_call.1} parent=51 // pred_fallthru
              _
            // Predicated region
            $region57: #{tpu_custom_call.1} parent=51 // pred_check
              _
            $region58: #{tpu_custom_call.1} parent=51 // pred_check_branch
              %297 = sbr.rel (0) target = $region60
            $region59: #{tpu_custom_call.1} parent=51 // pred_region
              loop: start=0, step=1, limit=1
              $region61: #{tpu_custom_call.1} parent=59 // loop_pre_header
                _
              $region62: #{tpu_custom_call.1} parent=59 // loop_header
                %s300 = sphi 0, %s304
                %p301 = scmp.ge.s32.totalorder %s300, 1
                %s305 = sphi %s291, %s291
                %s306 = sphi %s287, %s287
              $region63: #{tpu_custom_call.1} parent=59 // loop_header_branch
                %303 = sbr.rel (%p301) target = $region67
              $region64: #{tpu_custom_call.1} parent=59 // loop_body
                %v307 = vld [vmem:[%s305] sm:$0xf]
                %308 = vst [vmem:[%s306] sm:$0xf] %v307
                %v309 = vld [vmem:[%s305 + $0x8] sm:$0xf]
                %310 = vst [vmem:[%s306 + $0x4] sm:$0xf] %v309
                %v311 = vld [vmem:[%s305 + $0x10] sm:$0xf]
                %312 = vst [vmem:[%s306 + $0x8] sm:$0xf] %v311
                %v313 = vld [vmem:[%s305 + $0x18] sm:$0xf]
                %314 = vst [vmem:[%s306 + $0xc] sm:$0xf] %v313
                %v315 = vld [vmem:[%s305 + $0x20] sm:$0xf]
                %316 = vst [vmem:[%s306 + $0x10] sm:$0xf] %v315
                %v317 = vld [vmem:[%s305 + $0x28] sm:$0xf]
                %318 = vst [vmem:[%s306 + $0x14] sm:$0xf] %v317
                %v319 = vld [vmem:[%s305 + $0x30] sm:$0xf]
                %320 = vst [vmem:[%s306 + $0x18] sm:$0xf] %v319
                %v321 = vld [vmem:[%s305 + $0x38] sm:$0xf]
                %322 = vst [vmem:[%s306 + $0x1c] sm:$0xf] %v321
              $region65: #{tpu_custom_call.1} parent=59 // loop_footer
                %s304 = sadd.s32 1, %s300
              $region66: #{tpu_custom_call.1} parent=59 // loop_footer_branch
                %299 = sbr.rel target = $region62
              $region67: #{tpu_custom_call.1} parent=59 // loop_exit
                _
            $region60: #{tpu_custom_call.1} parent=51 // pred_fallthru
              _
          $region52: #{tpu_custom_call.1} parent=47 // pred_fallthru
            _
          %358 = vnop
        $region48: #{tpu_custom_call.1} parent=43 // pred_fallthru
          _
      $region44: #{tpu_custom_call.1} parent=5 // pred_fallthru
        _
      %p359 = scmp.le.s32.totalorder 1, %s18
      %p360 = scmp.lt.s32.totalorder %s18, 5
      %p361 = pnand %p359, %p360
      %p362 = pneg %p361
      // Predicated region
      $region86: #{tpu_custom_call.1} parent=5 // pred_check
        _
      $region87: #{tpu_custom_call.1} parent=5 // pred_check_branch
        %364 = sbr.rel (%p361) target = $region89
      $region88: #{tpu_custom_call.1} parent=5 // pred_region
        %s365 = ssub.s32 %s18, 1
        %s366 = sand.u32 %s45, 1
        %s367 = sand.u32 %s45, 1
        %s368 = smul.addr %s367, 32
        %s369 = scalar_lea.vmem [#allocation3], %s368
        // Predicated region
        $region90: #{tpu_custom_call.1} parent=88 // pred_check
          %p370 = pneg %p58
        $region91: #{tpu_custom_call.1} parent=88 // pred_check_branch
          %372 = sbr.rel (%p370) target = $region93
        $region92: #{tpu_custom_call.1} parent=88 // pred_region
          _
        $region93: #{tpu_custom_call.1} parent=88 // pred_fallthru
          _
        // Predicated region
        $region94: #{tpu_custom_call.1} parent=88 // pred_check
          %p373 = pneg %p121
        $region95: #{tpu_custom_call.1} parent=88 // pred_check_branch
          %375 = sbr.rel (%p373) target = $region97
        $region96: #{tpu_custom_call.1} parent=88 // pred_region
          %376 = dma.done [#allocation5], 3072
        $region97: #{tpu_custom_call.1} parent=88 // pred_fallthru
          _
        %s377 = sand.u32 %s45, 1
        %s378 = sand.u32 %s45, 1
        %s379 = smul.addr %s378, 32
        %s380 = scalar_lea.vmem [#allocation3], %s379
        %p381 = pneg %p58
        %p382 = pneg %p55
        %p383 = pneg %p79
        %p384 = pneg %p76
        %p385 = pneg %p100
        %p386 = pneg %p97
        %p387 = pneg %p121
        %p388 = pneg %p118
        %p389 = pneg %p142
        %p390 = pneg %p139
        %p391 = pneg %p163
        %p392 = pneg %p160
        %p393 = pneg %p184
        %p394 = pneg %p181
        %p395 = pneg %p205
        %p396 = pneg %p202
        %p397 = pneg %p231
        %p398 = pneg %p228
        %s399 = sand.u32 %s218, 1
        %s400 = scalar_lea.sflag [#allocation6], %s399
        %s401 = sand.u32 %s218, 1
        %s402 = smul.addr %s401, 8
        %s403 = scalar_lea.vmem [#allocation7], %s402
        %v405 = vld [vmem:[%s369] sm:$0xf]
        %v406 = vld [vmem:[%s369 + $0x4] sm:$0xf]
        %v407 = vld [vmem:[%s369 + $0x8] sm:$0xf]
        %v408 = vld [vmem:[%s369 + $0xc] sm:$0xf]
        %v409 = vld [vmem:[%s369 + $0x10] sm:$0xf]
        %v410 = vld [vmem:[%s369 + $0x14] sm:$0xf]
        %v411 = vld [vmem:[%s369 + $0x18] sm:$0xf]
        %v412 = vld [vmem:[%s369 + $0x1c] sm:$0xf]
        %v413 = vld [vmem:[%s6] sm:$0x1]
        %v414 = vld [vmem:[%s6 + $0x1] sm:$0x1]
        %v415 = vld [vmem:[%s6 + $0x2] sm:$0x1]
        %v416 = vld [vmem:[%s1] sm:$0x3]
        %v417 = vlaneseq
        %v418 = vshrl.u32 %v417, 7
        %v419 = vsub.s32 0, %v418
        %v420 = vrot.slane %v413, %v419
        %v429 = vunpack.c.l.b16 %v405
        %v430 = vunpack.c.l.b16 %v406
        %v431 = vunpack.c.l.b16 %v407
        %v432 = vunpack.c.l.b16 %v408
        %v433 = vunpack.c.l.b16 %v409
        %v434 = vunpack.c.l.b16 %v410
        %v435 = vunpack.c.l.b16 %v411
        %v436 = vunpack.c.l.b16 %v412
        %v437 = vpack.c.b16 %v430, %v429
        %v438 = vpack.c.b16 %v432, %v431
        %v439 = vpack.c.b16 %v434, %v433
        %v440 = vpack.c.b16 %v436, %v435
        %vm441 = vcmask 31744
        %v443 = vsel %vm441, %v437, 0
        %v446 = vsel %vm441, %v438, 0
        %v449 = vsel %vm441, %v439, 0
        %v452 = vsel %vm441, %v440, 0
        %vm454 = vcmask 1041408
        %v456 = vsel %vm454, %v416, 0
        %458 = vmatprep.subr.bf16.mxu0 0
        %459 = vmatpush1.bf16.msra.mxu0 %v456
        %460 = vmatprep.subr.bf16.mxu0 0
        %461 = vmatpush1.bf16.msra.mxu0 0
        %462 = vmatprep.subr.bf16.mxu0 0
        %463 = vmatpush1.bf16.msra.mxu0 0
        %464 = vmatprep.subr.bf16.mxu0 0
        %465 = vmatpush1.bf16.msra.mxu0 0
        %466 = vmatprep.subr.bf16.mxu0 0
        %467 = vmatpush1.bf16.msra.mxu0 0
        %468 = vmatprep.subr.bf16.mxu0 0
        %469 = vmatpush1.bf16.msra.mxu0 0
        %470 = vmatprep.subr.bf16.mxu0 0
        %471 = vmatpush1.bf16.msra.mxu0 0
        %472 = vmatprep.subr.bf16.mxu0 0
        %473 = vmatpush1.bf16.msra.mxu0 0
        %474 = vmatprep.subr.bf16.mxu0 0
        %475 = vmatpush1.bf16.msra.mxu0 0
        %476 = vmatprep.subr.bf16.mxu0 0
        %477 = vmatpush1.bf16.msra.mxu0 0
        %478 = vmatprep.subr.bf16.mxu0 0
        %479 = vmatpush1.bf16.msra.mxu0 0
        %480 = vmatprep.subr.bf16.mxu0 0
        %481 = vmatpush1.bf16.msra.mxu0 0
        %482 = vmatprep.subr.bf16.mxu0 0
        %483 = vmatpush1.bf16.msra.mxu0 0
        %484 = vmatprep.subr.bf16.mxu0 0
        %485 = vmatpush1.bf16.msra.mxu0 0
        %486 = vmatprep.subr.bf16.mxu0 0
        %487 = vmatpush1.bf16.msra.mxu0 0
        %488 = vmatprep.subr.bf16.mxu0 0
        %489 = vmatpush1.bf16.msra.mxu0 0
        %490 = vmatprep.mubr.bf16.mxu0 0
        %491 = vmatmul.mubr.bf16.gmra.mrb[0].mxu0 %v443
        %v492 = vpop.f32.mrb[0].mxu0
        %v493 = vadd.f32 %v420, %v492
        %v494 = vpop.f32.mrb[0].mxu0
        %v495 = vpop.f32.mrb[0].mxu0
        %v496 = vadd.f32 %v420, %v495
        %v497 = vpop.f32.mrb[0].mxu0
        %498 = vmatprep.mubr.bf16.mxu0 0
        %499 = vmatmul.mubr.bf16.gmra.mrb[0].mxu0 %v446
        %v500 = vpop.f32.mrb[0].mxu0
        %v501 = vadd.f32 %v420, %v500
        %v502 = vpop.f32.mrb[0].mxu0
        %v503 = vpop.f32.mrb[0].mxu0
        %v504 = vadd.f32 %v420, %v503
        %v505 = vpop.f32.mrb[0].mxu0
        %506 = vmatprep.mubr.bf16.mxu0 0
        %507 = vmatmul.mubr.bf16.gmra.mrb[0].mxu0 %v449
        %v508 = vpop.f32.mrb[0].mxu0
        %v509 = vadd.f32 %v420, %v508
        %v510 = vpop.f32.mrb[0].mxu0
        %v511 = vpop.f32.mrb[0].mxu0
        %v512 = vadd.f32 %v420, %v511
        %v513 = vpop.f32.mrb[0].mxu0
        %514 = vmatprep.mubr.bf16.mxu0 0
        %515 = vmatmul.mubr.bf16.gmra.mrb[0].mxu0 %v452
        %v516 = vpop.f32.mrb[0].mxu0
        %v517 = vadd.f32 %v420, %v516
        %v518 = vpop.f32.mrb[0].mxu0
        %v519 = vpop.f32.mrb[0].mxu0
        %v520 = vadd.f32 %v420, %v519
        %v521 = vpop.f32.mrb[0].mxu0
        %522 = vdwg.mxu0
        %v523 = vld [vmem:[%s2] sm:$0x3]
        %s524 = scalar_lea.vmem %s2, 2
        %v525 = vld [vmem:[%s524] sm:$0x3]
        %v527 = vsel %vm454, %v525, 0
        %529 = vmatprep.subr.bf16.mxu0 0
        %530 = vmatpush1.bf16.msra.mxu0 %v527
        %531 = vmatprep.subr.bf16.mxu0 0
        %532 = vmatpush1.bf16.msra.mxu0 0
        %533 = vmatprep.subr.bf16.mxu0 0
        %534 = vmatpush1.bf16.msra.mxu0 0
        %535 = vmatprep.subr.bf16.mxu0 0
        %536 = vmatpush1.bf16.msra.mxu0 0
        %537 = vmatprep.subr.bf16.mxu0 0
        %538 = vmatpush1.bf16.msra.mxu0 0
        %539 = vmatprep.subr.bf16.mxu0 0
        %540 = vmatpush1.bf16.msra.mxu0 0
        %541 = vmatprep.subr.bf16.mxu0 0
        %542 = vmatpush1.bf16.msra.mxu0 0
        %543 = vmatprep.subr.bf16.mxu0 0
        %544 = vmatpush1.bf16.msra.mxu0 0
        %545 = vmatprep.subr.bf16.mxu0 0
        %546 = vmatpush1.bf16.msra.mxu0 0
        %547 = vmatprep.subr.bf16.mxu0 0
        %548 = vmatpush1.bf16.msra.mxu0 0
        %549 = vmatprep.subr.bf16.mxu0 0
        %550 = vmatpush1.bf16.msra.mxu0 0
        %551 = vmatprep.subr.bf16.mxu0 0
        %552 = vmatpush1.bf16.msra.mxu0 0
        %553 = vmatprep.subr.bf16.mxu0 0
        %554 = vmatpush1.bf16.msra.mxu0 0
        %555 = vmatprep.subr.bf16.mxu0 0
        %556 = vmatpush1.bf16.msra.mxu0 0
        %557 = vmatprep.subr.bf16.mxu0 0
        %558 = vmatpush1.bf16.msra.mxu0 0
        %559 = vmatprep.subr.bf16.mxu0 0
        %560 = vmatpush1.bf16.msra.mxu0 0
        %561 = vmatprep.mubr.bf16.mxu0 0
        %562 = vmatmul.mubr.bf16.gmra.mrb[0].mxu0 %v443
        %v563 = vpop.f32.mrb[0].mxu0
        %v564 = vadd.f32 0.0, %v563
        %v565 = vpop.f32.mrb[0].mxu0
        %v566 = vpop.f32.mrb[0].mxu0
        %v567 = vadd.f32 0.0, %v566
        %v568 = vpop.f32.mrb[0].mxu0
        %569 = vmatprep.mubr.bf16.mxu0 0
        %570 = vmatmul.mubr.bf16.gmra.mrb[0].mxu0 %v446
        %v571 = vpop.f32.mrb[0].mxu0
        %v572 = vadd.f32 0.0, %v571
        %v573 = vpop.f32.mrb[0].mxu0
        %v574 = vpop.f32.mrb[0].mxu0
        %v575 = vadd.f32 0.0, %v574
        %v576 = vpop.f32.mrb[0].mxu0
        %577 = vmatprep.mubr.bf16.mxu0 0
        %578 = vmatmul.mubr.bf16.gmra.mrb[0].mxu0 %v449
        %v579 = vpop.f32.mrb[0].mxu0
        %v580 = vadd.f32 0.0, %v579
        %v581 = vpop.f32.mrb[0].mxu0
        %v582 = vpop.f32.mrb[0].mxu0
        %v583 = vadd.f32 0.0, %v582
        %v584 = vpop.f32.mrb[0].mxu0
        %585 = vmatprep.mubr.bf16.mxu0 0
        %586 = vmatmul.mubr.bf16.gmra.mrb[0].mxu0 %v452
        %v587 = vpop.f32.mrb[0].mxu0
        %v588 = vadd.f32 0.0, %v587
        %v589 = vpop.f32.mrb[0].mxu0
        %v590 = vpop.f32.mrb[0].mxu0
        %v591 = vadd.f32 0.0, %v590
        %v592 = vpop.f32.mrb[0].mxu0
        %593 = vdwg.mxu0
        %v595 = vunpack.c.l.b16 0
        %v596 = vpack.c.b16 %v429, %v595
        %v597 = vpack.c.b16 %v431, %v430
        %v598 = vpack.c.b16 %v433, %v432
        %v599 = vpack.c.b16 %v435, %v434
        %v601 = vsel %vm441, %v596, 0
        %v604 = vsel %vm441, %v597, 0
        %v607 = vsel %vm441, %v598, 0
        %v610 = vsel %vm441, %v599, 0
        %v613 = vsel %vm454, %v523, 0
        %615 = vmatprep.subr.bf16.mxu0 0
        %616 = vmatpush1.bf16.msra.mxu0 %v613
        %617 = vmatprep.subr.bf16.mxu0 0
        %618 = vmatpush1.bf16.msra.mxu0 0
        %619 = vmatprep.subr.bf16.mxu0 0
        %620 = vmatpush1.bf16.msra.mxu0 0
        %621 = vmatprep.subr.bf16.mxu0 0
        %622 = vmatpush1.bf16.msra.mxu0 0
        %623 = vmatprep.subr.bf16.mxu0 0
        %624 = vmatpush1.bf16.msra.mxu0 0
        %625 = vmatprep.subr.bf16.mxu0 0
        %626 = vmatpush1.bf16.msra.mxu0 0
        %627 = vmatprep.subr.bf16.mxu0 0
        %628 = vmatpush1.bf16.msra.mxu0 0
        %629 = vmatprep.subr.bf16.mxu0 0
        %630 = vmatpush1.bf16.msra.mxu0 0
        %631 = vmatprep.subr.bf16.mxu0 0
        %632 = vmatpush1.bf16.msra.mxu0 0
        %633 = vmatprep.subr.bf16.mxu0 0
        %634 = vmatpush1.bf16.msra.mxu0 0
        %635 = vmatprep.subr.bf16.mxu0 0
        %636 = vmatpush1.bf16.msra.mxu0 0
        %637 = vmatprep.subr.bf16.mxu0 0
        %638 = vmatpush1.bf16.msra.mxu0 0
        %639 = vmatprep.subr.bf16.mxu0 0
        %640 = vmatpush1.bf16.msra.mxu0 0
        %641 = vmatprep.subr.bf16.mxu0 0
        %642 = vmatpush1.bf16.msra.mxu0 0
        %643 = vmatprep.subr.bf16.mxu0 0
        %644 = vmatpush1.bf16.msra.mxu0 0
        %645 = vmatprep.subr.bf16.mxu0 0
        %646 = vmatpush1.bf16.msra.mxu0 0
        %647 = vmatprep.mubr.bf16.mxu0 0
        %648 = vmatmul.mubr.bf16.gmra.mrb[0].mxu0 %v601
        %v649 = vpop.f32.mrb[0].mxu0
        %v650 = vadd.f32 %v564, %v649
        %v651 = vpop.f32.mrb[0].mxu0
        %v652 = vpop.f32.mrb[0].mxu0
        %v653 = vadd.f32 %v567, %v652
        %v654 = vpop.f32.mrb[0].mxu0
        %655 = vmatprep.mubr.bf16.mxu0 0
        %656 = vmatmul.mubr.bf16.gmra.mrb[0].mxu0 %v604
        %v657 = vpop.f32.mrb[0].mxu0
        %v658 = vadd.f32 %v572, %v657
        %v659 = vpop.f32.mrb[0].mxu0
        %v660 = vpop.f32.mrb[0].mxu0
        %v661 = vadd.f32 %v575, %v660
        %v662 = vpop.f32.mrb[0].mxu0
        %663 = vmatprep.mubr.bf16.mxu0 0
        %664 = vmatmul.mubr.bf16.gmra.mrb[0].mxu0 %v607
        %v665 = vpop.f32.mrb[0].mxu0
        %v666 = vadd.f32 %v580, %v665
        %v667 = vpop.f32.mrb[0].mxu0
        %v668 = vpop.f32.mrb[0].mxu0
        %v669 = vadd.f32 %v583, %v668
        %v670 = vpop.f32.mrb[0].mxu0
        %671 = vmatprep.mubr.bf16.mxu0 0
        %672 = vmatmul.mubr.bf16.gmra.mrb[0].mxu0 %v610
        %v673 = vpop.f32.mrb[0].mxu0
        %v674 = vadd.f32 %v588, %v673
        %v675 = vpop.f32.mrb[0].mxu0
        %v676 = vpop.f32.mrb[0].mxu0
        %v677 = vadd.f32 %v591, %v676
        %v678 = vpop.f32.mrb[0].mxu0
        %679 = vdwg.mxu0
        %s680 = scalar_lea.vmem %s2, 4
        %v681 = vld [vmem:[%s680] sm:$0x3]
        %v682 = vpack.c.b16 %v595, %v436
        %v684 = vsel %vm441, %v682, 0
        %v687 = vsel %vm454, %v681, 0
        %689 = vmatprep.subr.bf16.mxu0 0
        %690 = vmatpush1.bf16.msra.mxu0 %v687
        %691 = vmatprep.subr.bf16.mxu0 0
        %692 = vmatpush1.bf16.msra.mxu0 0
        %693 = vmatprep.subr.bf16.mxu0 0
        %694 = vmatpush1.bf16.msra.mxu0 0
        %695 = vmatprep.subr.bf16.mxu0 0
        %696 = vmatpush1.bf16.msra.mxu0 0
        %697 = vmatprep.subr.bf16.mxu0 0
        %698 = vmatpush1.bf16.msra.mxu0 0
        %699 = vmatprep.subr.bf16.mxu0 0
        %700 = vmatpush1.bf16.msra.mxu0 0
        %701 = vmatprep.subr.bf16.mxu0 0
        %702 = vmatpush1.bf16.msra.mxu0 0
        %703 = vmatprep.subr.bf16.mxu0 0
        %704 = vmatpush1.bf16.msra.mxu0 0
        %705 = vmatprep.subr.bf16.mxu0 0
        %706 = vmatpush1.bf16.msra.mxu0 0
        %707 = vmatprep.subr.bf16.mxu0 0
        %708 = vmatpush1.bf16.msra.mxu0 0
        %709 = vmatprep.subr.bf16.mxu0 0
        %710 = vmatpush1.bf16.msra.mxu0 0
        %711 = vmatprep.subr.bf16.mxu0 0
        %712 = vmatpush1.bf16.msra.mxu0 0
        %713 = vmatprep.subr.bf16.mxu0 0
        %714 = vmatpush1.bf16.msra.mxu0 0
        %715 = vmatprep.subr.bf16.mxu0 0
        %716 = vmatpush1.bf16.msra.mxu0 0
        %717 = vmatprep.subr.bf16.mxu0 0
        %718 = vmatpush1.bf16.msra.mxu0 0
        %719 = vmatprep.subr.bf16.mxu0 0
        %720 = vmatpush1.bf16.msra.mxu0 0
        %721 = vmatprep.mubr.bf16.mxu0 0
        %722 = vmatmul.mubr.bf16.gmra.mrb[0].mxu0 %v604
        %v723 = vpop.f32.mrb[0].mxu0
        %v724 = vadd.f32 0.0, %v723
        %v725 = vpop.f32.mrb[0].mxu0
        %v726 = vpop.f32.mrb[0].mxu0
        %v727 = vadd.f32 0.0, %v726
        %v728 = vpop.f32.mrb[0].mxu0
        %729 = vmatprep.mubr.bf16.mxu0 0
        %730 = vmatmul.mubr.bf16.gmra.mrb[0].mxu0 %v607
        %v731 = vpop.f32.mrb[0].mxu0
        %v732 = vadd.f32 0.0, %v731
        %v733 = vpop.f32.mrb[0].mxu0
        %v734 = vpop.f32.mrb[0].mxu0
        %v735 = vadd.f32 0.0, %v734
        %v736 = vpop.f32.mrb[0].mxu0
        %737 = vmatprep.mubr.bf16.mxu0 0
        %738 = vmatmul.mubr.bf16.gmra.mrb[0].mxu0 %v610
        %v739 = vpop.f32.mrb[0].mxu0
        %v740 = vadd.f32 0.0, %v739
        %v741 = vpop.f32.mrb[0].mxu0
        %v742 = vpop.f32.mrb[0].mxu0
        %v743 = vadd.f32 0.0, %v742
        %v744 = vpop.f32.mrb[0].mxu0
        %745 = vmatprep.mubr.bf16.mxu0 0
        %746 = vmatmul.mubr.bf16.gmra.mrb[0].mxu0 %v684
        %v747 = vpop.f32.mrb[0].mxu0
        %v748 = vadd.f32 0.0, %v747
        %v749 = vpop.f32.mrb[0].mxu0
        %v750 = vpop.f32.mrb[0].mxu0
        %v751 = vadd.f32 0.0, %v750
        %v752 = vpop.f32.mrb[0].mxu0
        %753 = vdwg.mxu0
        %v754 = vadd.f32 %v650, %v724
        %v755 = vadd.f32 %v653, %v727
        %v756 = vadd.f32 %v658, %v732
        %v757 = vadd.f32 %v661, %v735
        %v758 = vadd.f32 %v666, %v740
        %v759 = vadd.f32 %v669, %v743
        %v760 = vadd.f32 %v674, %v748
        %v761 = vadd.f32 %v677, %v751
        %v762 = vlaneseq
        %v763 = vshrl.u32 %v762, 7
        %v764 = vsub.s32 0, %v763
        %v765 = vrot.slane %v414, %v764
        %v766 = vadd.f32 %v754, %v765
        %v767 = vadd.f32 %v755, %v765
        %v768 = vadd.f32 %v756, %v765
        %v769 = vadd.f32 %v757, %v765
        %v770 = vadd.f32 %v758, %v765
        %v771 = vadd.f32 %v759, %v765
        %v772 = vadd.f32 %v760, %v765
        %v773 = vadd.f32 %v761, %v765
        %v774 = vmax.f32 %v766, 0.0
        %v775 = vmax.f32 %v767, 0.0
        %v776 = vmax.f32 %v768, 0.0
        %v777 = vmax.f32 %v769, 0.0
        %v778 = vmax.f32 %v770, 0.0
        %v779 = vmax.f32 %v771, 0.0
        %v780 = vmax.f32 %v772, 0.0
        %v781 = vmax.f32 %v773, 0.0
        %v782 = vpack.c.bf16 %v775, %v774
        %v783 = vpack.c.bf16 %v777, %v776
        %v784 = vpack.c.bf16 %v779, %v778
        %v785 = vpack.c.bf16 %v781, %v780
        %v790 = vunpack.c.l.b16 %v782
        %v791 = vunpack.c.h.b16 %v782
        %v792 = vunpack.c.l.b16 %v783
        %v793 = vunpack.c.h.b16 %v783
        %v794 = vunpack.c.l.b16 %v784
        %v795 = vunpack.c.h.b16 %v784
        %v796 = vunpack.c.l.b16 %v785
        %v797 = vunpack.c.h.b16 %v785
        %v798 = vld [vmem:[#allocation4] sm:$0xf]
        %v799 = vld [vmem:[#allocation4 + $0x4] sm:$0xf]
        %v800 = vld [vmem:[#allocation4 + $0x8] sm:$0xf]
        %v801 = vld [vmem:[#allocation4 + $0xc] sm:$0xf]
        %v802 = vld [vmem:[#allocation4 + $0x10] sm:$0xf]
        %v803 = vld [vmem:[#allocation4 + $0x14] sm:$0xf]
        %v804 = vld [vmem:[#allocation4 + $0x18] sm:$0xf]
        %v805 = vld [vmem:[#allocation4 + $0x1c] sm:$0xf]
        %v806 = vld [vmem:[#allocation4 + $0x20] sm:$0xf]
        %v807 = vld [vmem:[#allocation4 + $0x24] sm:$0xf]
        %v808 = vld [vmem:[#allocation4 + $0x28] sm:$0xf]
        %v809 = vld [vmem:[#allocation4 + $0x2c] sm:$0xf]
        %v810 = vld [vmem:[#allocation4 + $0x30] sm:$0xf]
        %v811 = vld [vmem:[#allocation4 + $0x34] sm:$0xf]
        %v812 = vld [vmem:[#allocation4 + $0x38] sm:$0xf]
        %v813 = vld [vmem:[#allocation4 + $0x3c] sm:$0xf]
        %s814 = scalar_lea.vmem [#allocation4], 64
        %v815 = vld [vmem:[%s814] sm:$0xf]
        %v816 = vld [vmem:[%s814 + $0x4] sm:$0xf]
        %v817 = vld [vmem:[%s814 + $0x8] sm:$0xf]
        %v818 = vld [vmem:[%s814 + $0xc] sm:$0xf]
        %v819 = vld [vmem:[%s814 + $0x10] sm:$0xf]
        %v820 = vld [vmem:[%s814 + $0x14] sm:$0xf]
        %v821 = vld [vmem:[%s814 + $0x18] sm:$0xf]
        %v822 = vld [vmem:[%s814 + $0x1c] sm:$0xf]
        %v823 = vld [vmem:[%s814 + $0x20] sm:$0xf]
        %v824 = vld [vmem:[%s814 + $0x24] sm:$0xf]
        %v825 = vld [vmem:[%s814 + $0x28] sm:$0xf]
        %v826 = vld [vmem:[%s814 + $0x2c] sm:$0xf]
        %v827 = vld [vmem:[%s814 + $0x30] sm:$0xf]
        %v828 = vld [vmem:[%s814 + $0x34] sm:$0xf]
        %v829 = vld [vmem:[%s814 + $0x38] sm:$0xf]
        %v830 = vld [vmem:[%s814 + $0x3c] sm:$0xf]
        %v847 = vunpack.c.l.b16 %v815
        %v848 = vunpack.c.l.b16 %v816
        %v849 = vunpack.c.l.b16 %v817
        %v850 = vunpack.c.l.b16 %v818
        %v851 = vunpack.c.l.b16 %v819
        %v852 = vunpack.c.l.b16 %v820
        %v853 = vunpack.c.l.b16 %v821
        %v854 = vunpack.c.l.b16 %v822
        %v855 = vunpack.c.l.b16 %v823
        %v856 = vunpack.c.l.b16 %v824
        %v857 = vunpack.c.l.b16 %v825
        %v858 = vunpack.c.l.b16 %v826
        %v859 = vunpack.c.l.b16 %v827
        %v860 = vunpack.c.l.b16 %v828
        %v861 = vunpack.c.l.b16 %v829
        %v862 = vunpack.c.l.b16 %v830
        %v863 = vpack.c.b16 %v848, %v847
        %v864 = vpack.c.b16 %v850, %v849
        %v865 = vpack.c.b16 %v852, %v851
        %v866 = vpack.c.b16 %v854, %v853
        %v867 = vpack.c.b16 %v856, %v855
        %v868 = vpack.c.b16 %v858, %v857
        %v869 = vpack.c.b16 %v860, %v859
        %v870 = vpack.c.b16 %v862, %v861
        %879 = vmatprep.subr.bf16.mxu0 0
        %880 = vmatpush1.bf16.msra.mxu0 %v863
        %881 = vmatprep.subr.bf16.mxu0 0
        %882 = vmatpush1.bf16.msra.mxu0 %v864
        %883 = vmatprep.subr.bf16.mxu0 0
        %884 = vmatpush1.bf16.msra.mxu0 %v865
        %885 = vmatprep.subr.bf16.mxu0 0
        %886 = vmatpush1.bf16.msra.mxu0 %v866
        %887 = vmatprep.subr.bf16.mxu0 0
        %888 = vmatpush1.bf16.msra.mxu0 %v867
        %889 = vmatprep.subr.bf16.mxu0 0
        %890 = vmatpush1.bf16.msra.mxu0 %v868
        %891 = vmatprep.subr.bf16.mxu0 0
        %892 = vmatpush1.bf16.msra.mxu0 %v869
        %893 = vmatprep.subr.bf16.mxu0 0
        %894 = vmatpush1.bf16.msra.mxu0 %v870
        %895 = vmatprep.subr.bf16.mxu0 0
        %896 = vmatpush1.bf16.msra.mxu0 0
        %897 = vmatprep.subr.bf16.mxu0 0
        %898 = vmatpush1.bf16.msra.mxu0 0
        %899 = vmatprep.subr.bf16.mxu0 0
        %900 = vmatpush1.bf16.msra.mxu0 0
        %901 = vmatprep.subr.bf16.mxu0 0
        %902 = vmatpush1.bf16.msra.mxu0 0
        %903 = vmatprep.subr.bf16.mxu0 0
        %904 = vmatpush1.bf16.msra.mxu0 0
        %905 = vmatprep.subr.bf16.mxu0 0
        %906 = vmatpush1.bf16.msra.mxu0 0
        %907 = vmatprep.subr.bf16.mxu0 0
        %908 = vmatpush1.bf16.msra.mxu0 0
        %909 = vmatprep.subr.bf16.mxu0 0
        %910 = vmatpush1.bf16.msra.mxu0 0
        %911 = vmatprep.mubr.bf16.mxu0 0
        %912 = vmatmul.mubr.bf16.gmra.mrb[0].mxu0 %v782
        %v913 = vpop.f32.mrb[0].mxu0
        %v914 = vadd.f32 0.0, %v913
        %v915 = vpop.f32.mrb[0].mxu0
        %v916 = vpop.f32.mrb[0].mxu0
        %v917 = vadd.f32 0.0, %v916
        %v918 = vpop.f32.mrb[0].mxu0
        %919 = vmatprep.mubr.bf16.mxu0 0
        %920 = vmatmul.mubr.bf16.gmra.mrb[0].mxu0 %v783
        %v921 = vpop.f32.mrb[0].mxu0
        %v922 = vadd.f32 0.0, %v921
        %v923 = vpop.f32.mrb[0].mxu0
        %v924 = vpop.f32.mrb[0].mxu0
        %v925 = vadd.f32 0.0, %v924
        %v926 = vpop.f32.mrb[0].mxu0
        %927 = vmatprep.mubr.bf16.mxu0 0
        %928 = vmatmul.mubr.bf16.gmra.mrb[0].mxu0 %v784
        %v929 = vpop.f32.mrb[0].mxu0
        %v930 = vadd.f32 0.0, %v929
        %v931 = vpop.f32.mrb[0].mxu0
        %v932 = vpop.f32.mrb[0].mxu0
        %v933 = vadd.f32 0.0, %v932
        %v934 = vpop.f32.mrb[0].mxu0
        %935 = vmatprep.mubr.bf16.mxu0 0
        %936 = vmatmul.mubr.bf16.gmra.mrb[0].mxu0 %v785
        %v937 = vpop.f32.mrb[0].mxu0
        %v938 = vadd.f32 0.0, %v937
        %v939 = vpop.f32.mrb[0].mxu0
        %v940 = vpop.f32.mrb[0].mxu0
        %v941 = vadd.f32 0.0, %v940
        %v942 = vpop.f32.mrb[0].mxu0
        %943 = vdwg.mxu0
        %v944 = vpack.c.b16 %v790, %v595
        %v945 = vpack.c.b16 %v792, %v791
        %v946 = vpack.c.b16 %v794, %v793
        %v947 = vpack.c.b16 %v796, %v795
        %v968 = vunpack.c.l.b16 %v798
        %v969 = vunpack.c.l.b16 %v799
        %v970 = vunpack.c.l.b16 %v800
        %v971 = vunpack.c.l.b16 %v801
        %v972 = vunpack.c.l.b16 %v802
        %v973 = vunpack.c.l.b16 %v803
        %v974 = vunpack.c.l.b16 %v804
        %v975 = vunpack.c.l.b16 %v805
        %v976 = vunpack.c.l.b16 %v806
        %v977 = vunpack.c.l.b16 %v807
        %v978 = vunpack.c.l.b16 %v808
        %v979 = vunpack.c.l.b16 %v809
        %v980 = vunpack.c.l.b16 %v810
        %v981 = vunpack.c.l.b16 %v811
        %v982 = vunpack.c.l.b16 %v812
        %v983 = vunpack.c.l.b16 %v813
        %v984 = vpack.c.b16 %v969, %v968
        %v985 = vpack.c.b16 %v971, %v970
        %v986 = vpack.c.b16 %v973, %v972
        %v987 = vpack.c.b16 %v975, %v974
        %v988 = vpack.c.b16 %v977, %v976
        %v989 = vpack.c.b16 %v979, %v978
        %v990 = vpack.c.b16 %v981, %v980
        %v991 = vpack.c.b16 %v983, %v982
        %1000 = vmatprep.subr.bf16.mxu0 0
        %1001 = vmatpush1.bf16.msra.mxu0 %v984
        %1002 = vmatprep.subr.bf16.mxu0 0
        %1003 = vmatpush1.bf16.msra.mxu0 %v985
        %1004 = vmatprep.subr.bf16.mxu0 0
        %1005 = vmatpush1.bf16.msra.mxu0 %v986
        %1006 = vmatprep.subr.bf16.mxu0 0
        %1007 = vmatpush1.bf16.msra.mxu0 %v987
        %1008 = vmatprep.subr.bf16.mxu0 0
        %1009 = vmatpush1.bf16.msra.mxu0 %v988
        %1010 = vmatprep.subr.bf16.mxu0 0
        %1011 = vmatpush1.bf16.msra.mxu0 %v989
        %1012 = vmatprep.subr.bf16.mxu0 0
        %1013 = vmatpush1.bf16.msra.mxu0 %v990
        %1014 = vmatprep.subr.bf16.mxu0 0
        %1015 = vmatpush1.bf16.msra.mxu0 %v991
        %1016 = vmatprep.subr.bf16.mxu0 0
        %1017 = vmatpush1.bf16.msra.mxu0 0
        %1018 = vmatprep.subr.bf16.mxu0 0
        %1019 = vmatpush1.bf16.msra.mxu0 0
        %1020 = vmatprep.subr.bf16.mxu0 0
        %1021 = vmatpush1.bf16.msra.mxu0 0
        %1022 = vmatprep.subr.bf16.mxu0 0
        %1023 = vmatpush1.bf16.msra.mxu0 0
        %1024 = vmatprep.subr.bf16.mxu0 0
        %1025 = vmatpush1.bf16.msra.mxu0 0
        %1026 = vmatprep.subr.bf16.mxu0 0
        %1027 = vmatpush1.bf16.msra.mxu0 0
        %1028 = vmatprep.subr.bf16.mxu0 0
        %1029 = vmatpush1.bf16.msra.mxu0 0
        %1030 = vmatprep.subr.bf16.mxu0 0
        %1031 = vmatpush1.bf16.msra.mxu0 0
        %1032 = vmatprep.mubr.bf16.mxu0 0
        %1033 = vmatmul.mubr.bf16.gmra.mrb[0].mxu0 %v944
        %v1034 = vpop.f32.mrb[0].mxu0
        %v1035 = vadd.f32 %v914, %v1034
        %v1036 = vpop.f32.mrb[0].mxu0
        %v1037 = vpop.f32.mrb[0].mxu0
        %v1038 = vadd.f32 %v917, %v1037
        %v1039 = vpop.f32.mrb[0].mxu0
        %1040 = vmatprep.mubr.bf16.mxu0 0
        %1041 = vmatmul.mubr.bf16.gmra.mrb[0].mxu0 %v945
        %v1042 = vpop.f32.mrb[0].mxu0
        %v1043 = vadd.f32 %v922, %v1042
        %v1044 = vpop.f32.mrb[0].mxu0
        %v1045 = vpop.f32.mrb[0].mxu0
        %v1046 = vadd.f32 %v925, %v1045
        %v1047 = vpop.f32.mrb[0].mxu0
        %1048 = vmatprep.mubr.bf16.mxu0 0
        %1049 = vmatmul.mubr.bf16.gmra.mrb[0].mxu0 %v946
        %v1050 = vpop.f32.mrb[0].mxu0
        %v1051 = vadd.f32 %v930, %v1050
        %v1052 = vpop.f32.mrb[0].mxu0
        %v1053 = vpop.f32.mrb[0].mxu0
        %v1054 = vadd.f32 %v933, %v1053
        %v1055 = vpop.f32.mrb[0].mxu0
        %1056 = vmatprep.mubr.bf16.mxu0 0
        %1057 = vmatmul.mubr.bf16.gmra.mrb[0].mxu0 %v947
        %v1058 = vpop.f32.mrb[0].mxu0
        %v1059 = vadd.f32 %v938, %v1058
        %v1060 = vpop.f32.mrb[0].mxu0
        %v1061 = vpop.f32.mrb[0].mxu0
        %v1062 = vadd.f32 %v941, %v1061
        %v1063 = vpop.f32.mrb[0].mxu0
        %1064 = vdwg.mxu0
        %s1065 = scalar_lea.vmem [#allocation4], 128
        %v1066 = vld [vmem:[%s1065] sm:$0xf]
        %v1067 = vld [vmem:[%s1065 + $0x4] sm:$0xf]
        %v1068 = vld [vmem:[%s1065 + $0x8] sm:$0xf]
        %v1069 = vld [vmem:[%s1065 + $0xc] sm:$0xf]
        %v1070 = vld [vmem:[%s1065 + $0x10] sm:$0xf]
        %v1071 = vld [vmem:[%s1065 + $0x14] sm:$0xf]
        %v1072 = vld [vmem:[%s1065 + $0x18] sm:$0xf]
        %v1073 = vld [vmem:[%s1065 + $0x1c] sm:$0xf]
        %v1074 = vld [vmem:[%s1065 + $0x20] sm:$0xf]
        %v1075 = vld [vmem:[%s1065 + $0x24] sm:$0xf]
        %v1076 = vld [vmem:[%s1065 + $0x28] sm:$0xf]
        %v1077 = vld [vmem:[%s1065 + $0x2c] sm:$0xf]
        %v1078 = vld [vmem:[%s1065 + $0x30] sm:$0xf]
        %v1079 = vld [vmem:[%s1065 + $0x34] sm:$0xf]
        %v1080 = vld [vmem:[%s1065 + $0x38] sm:$0xf]
        %v1081 = vld [vmem:[%s1065 + $0x3c] sm:$0xf]
        %v1082 = vpack.c.b16 %v595, %v797
        %v1100 = vunpack.c.l.b16 %v1066
        %v1101 = vunpack.c.l.b16 %v1067
        %v1102 = vunpack.c.l.b16 %v1068
        %v1103 = vunpack.c.l.b16 %v1069
        %v1104 = vunpack.c.l.b16 %v1070
        %v1105 = vunpack.c.l.b16 %v1071
        %v1106 = vunpack.c.l.b16 %v1072
        %v1107 = vunpack.c.l.b16 %v1073
        %v1108 = vunpack.c.l.b16 %v1074
        %v1109 = vunpack.c.l.b16 %v1075
        %v1110 = vunpack.c.l.b16 %v1076
        %v1111 = vunpack.c.l.b16 %v1077
        %v1112 = vunpack.c.l.b16 %v1078
        %v1113 = vunpack.c.l.b16 %v1079
        %v1114 = vunpack.c.l.b16 %v1080
        %v1115 = vunpack.c.l.b16 %v1081
        %v1116 = vpack.c.b16 %v1101, %v1100
        %v1117 = vpack.c.b16 %v1103, %v1102
        %v1118 = vpack.c.b16 %v1105, %v1104
        %v1119 = vpack.c.b16 %v1107, %v1106
        %v1120 = vpack.c.b16 %v1109, %v1108
        %v1121 = vpack.c.b16 %v1111, %v1110
        %v1122 = vpack.c.b16 %v1113, %v1112
        %v1123 = vpack.c.b16 %v1115, %v1114
        %1132 = vmatprep.subr.bf16.mxu0 0
        %1133 = vmatpush1.bf16.msra.mxu0 %v1116
        %1134 = vmatprep.subr.bf16.mxu0 0
        %1135 = vmatpush1.bf16.msra.mxu0 %v1117
        %1136 = vmatprep.subr.bf16.mxu0 0
        %1137 = vmatpush1.bf16.msra.mxu0 %v1118
        %1138 = vmatprep.subr.bf16.mxu0 0
        %1139 = vmatpush1.bf16.msra.mxu0 %v1119
        %1140 = vmatprep.subr.bf16.mxu0 0
        %1141 = vmatpush1.bf16.msra.mxu0 %v1120
        %1142 = vmatprep.subr.bf16.mxu0 0
        %1143 = vmatpush1.bf16.msra.mxu0 %v1121
        %1144 = vmatprep.subr.bf16.mxu0 0
        %1145 = vmatpush1.bf16.msra.mxu0 %v1122
        %1146 = vmatprep.subr.bf16.mxu0 0
        %1147 = vmatpush1.bf16.msra.mxu0 %v1123
        %1148 = vmatprep.subr.bf16.mxu0 0
        %1149 = vmatpush1.bf16.msra.mxu0 0
        %1150 = vmatprep.subr.bf16.mxu0 0
        %1151 = vmatpush1.bf16.msra.mxu0 0
        %1152 = vmatprep.subr.bf16.mxu0 0
        %1153 = vmatpush1.bf16.msra.mxu0 0
        %1154 = vmatprep.subr.bf16.mxu0 0
        %1155 = vmatpush1.bf16.msra.mxu0 0
        %1156 = vmatprep.subr.bf16.mxu0 0
        %1157 = vmatpush1.bf16.msra.mxu0 0
        %1158 = vmatprep.subr.bf16.mxu0 0
        %1159 = vmatpush1.bf16.msra.mxu0 0
        %1160 = vmatprep.subr.bf16.mxu0 0
        %1161 = vmatpush1.bf16.msra.mxu0 0
        %1162 = vmatprep.subr.bf16.mxu0 0
        %1163 = vmatpush1.bf16.msra.mxu0 0
        %1164 = vmatprep.mubr.bf16.mxu0 0
        %1165 = vmatmul.mubr.bf16.gmra.mrb[0].mxu0 %v945
        %v1166 = vpop.f32.mrb[0].mxu0
        %v1167 = vadd.f32 0.0, %v1166
        %v1168 = vpop.f32.mrb[0].mxu0
        %v1169 = vpop.f32.mrb[0].mxu0
        %v1170 = vadd.f32 0.0, %v1169
        %v1171 = vpop.f32.mrb[0].mxu0
        %1172 = vmatprep.mubr.bf16.mxu0 0
        %1173 = vmatmul.mubr.bf16.gmra.mrb[0].mxu0 %v946
        %v1174 = vpop.f32.mrb[0].mxu0
        %v1175 = vadd.f32 0.0, %v1174
        %v1176 = vpop.f32.mrb[0].mxu0
        %v1177 = vpop.f32.mrb[0].mxu0
        %v1178 = vadd.f32 0.0, %v1177
        %v1179 = vpop.f32.mrb[0].mxu0
        %1180 = vmatprep.mubr.bf16.mxu0 0
        %1181 = vmatmul.mubr.bf16.gmra.mrb[0].mxu0 %v947
        %v1182 = vpop.f32.mrb[0].mxu0
        %v1183 = vadd.f32 0.0, %v1182
        %v1184 = vpop.f32.mrb[0].mxu0
        %v1185 = vpop.f32.mrb[0].mxu0
        %v1186 = vadd.f32 0.0, %v1185
        %v1187 = vpop.f32.mrb[0].mxu0
        %1188 = vmatprep.mubr.bf16.mxu0 0
        %1189 = vmatmul.mubr.bf16.gmra.mrb[0].mxu0 %v1082
        %v1190 = vpop.f32.mrb[0].mxu0
        %v1191 = vadd.f32 0.0, %v1190
        %v1192 = vpop.f32.mrb[0].mxu0
        %v1193 = vpop.f32.mrb[0].mxu0
        %v1194 = vadd.f32 0.0, %v1193
        %v1195 = vpop.f32.mrb[0].mxu0
        %1196 = vdwg.mxu0
        %v1197 = vadd.f32 %v1035, %v1167
        %v1198 = vadd.f32 %v1038, %v1170
        %v1199 = vadd.f32 %v1043, %v1175
        %v1200 = vadd.f32 %v1046, %v1178
        %v1201 = vadd.f32 %v1051, %v1183
        %v1202 = vadd.f32 %v1054, %v1186
        %v1203 = vadd.f32 %v1059, %v1191
        %v1204 = vadd.f32 %v1062, %v1194
        %v1205 = vlaneseq
        %v1206 = vshrl.u32 %v1205, 7
        %v1207 = vsub.s32 0, %v1206
        %v1208 = vrot.slane %v415, %v1207
        %v1209 = vadd.f32 %v1197, %v1208
        %v1210 = vadd.f32 %v1198, %v1208
        %v1211 = vadd.f32 %v1199, %v1208
        %v1212 = vadd.f32 %v1200, %v1208
        %v1213 = vadd.f32 %v1201, %v1208
        %v1214 = vadd.f32 %v1202, %v1208
        %v1215 = vadd.f32 %v1203, %v1208
        %v1216 = vadd.f32 %v1204, %v1208
        %v1217 = vmax.f32 %v1209, 0.0
        %v1218 = vmax.f32 %v1210, 0.0
        %v1219 = vmax.f32 %v1211, 0.0
        %v1220 = vmax.f32 %v1212, 0.0
        %v1221 = vmax.f32 %v1213, 0.0
        %v1222 = vmax.f32 %v1214, 0.0
        %v1223 = vmax.f32 %v1215, 0.0
        %v1224 = vmax.f32 %v1216, 0.0
        %v1225 = vadd.f32 %v1217, %v493
        %v1226 = vadd.f32 %v1218, %v496
        %v1227 = vadd.f32 %v1219, %v501
        %v1228 = vadd.f32 %v1220, %v504
        %v1229 = vadd.f32 %v1221, %v509
        %v1230 = vadd.f32 %v1222, %v512
        %v1231 = vadd.f32 %v1223, %v517
        %v1232 = vadd.f32 %v1224, %v520
        %v1233 = vrot.slane %v1225, 4
        %v1234 = vadd.f32 %v1225, %v1233
        %v1235 = vrot.slane %v1234, 2
        %v1236 = vadd.f32 %v1234, %v1235
        %v1237 = vrot.slane %v1236, 1
        %v1238 = vadd.f32 %v1236, %v1237
        %v1239 = vrot.slane %v1226, 4
        %v1240 = vadd.f32 %v1226, %v1239
        %v1241 = vrot.slane %v1240, 2
        %v1242 = vadd.f32 %v1240, %v1241
        %v1243 = vrot.slane %v1242, 1
        %v1244 = vadd.f32 %v1242, %v1243
        %v1245 = vrot.slane %v1227, 4
        %v1246 = vadd.f32 %v1227, %v1245
        %v1247 = vrot.slane %v1246, 2
        %v1248 = vadd.f32 %v1246, %v1247
        %v1249 = vrot.slane %v1248, 1
        %v1250 = vadd.f32 %v1248, %v1249
        %v1251 = vrot.slane %v1228, 4
        %v1252 = vadd.f32 %v1228, %v1251
        %v1253 = vrot.slane %v1252, 2
        %v1254 = vadd.f32 %v1252, %v1253
        %v1255 = vrot.slane %v1254, 1
        %v1256 = vadd.f32 %v1254, %v1255
        %v1257 = vrot.slane %v1229, 4
        %v1258 = vadd.f32 %v1229, %v1257
        %v1259 = vrot.slane %v1258, 2
        %v1260 = vadd.f32 %v1258, %v1259
        %v1261 = vrot.slane %v1260, 1
        %v1262 = vadd.f32 %v1260, %v1261
        %v1263 = vrot.slane %v1230, 4
        %v1264 = vadd.f32 %v1230, %v1263
        %v1265 = vrot.slane %v1264, 2
        %v1266 = vadd.f32 %v1264, %v1265
        %v1267 = vrot.slane %v1266, 1
        %v1268 = vadd.f32 %v1266, %v1267
        %v1269 = vrot.slane %v1231, 4
        %v1270 = vadd.f32 %v1231, %v1269
        %v1271 = vrot.slane %v1270, 2
        %v1272 = vadd.f32 %v1270, %v1271
        %v1273 = vrot.slane %v1272, 1
        %v1274 = vadd.f32 %v1272, %v1273
        %v1275 = vrot.slane %v1232, 4
        %v1276 = vadd.f32 %v1232, %v1275
        %v1277 = vrot.slane %v1276, 2
        %v1278 = vadd.f32 %v1276, %v1277
        %v1279 = vrot.slane %v1278, 1
        %v1280 = vadd.f32 %v1278, %v1279
        %p1281 = scmp.eq.s32.totalorder %s28, 0
        // Predicated region
        $region98: #{tpu_custom_call.1} parent=88 // pred_check
          %p1282 = pneg %p1281
        $region99: #{tpu_custom_call.1} parent=88 // pred_check_branch
          %1284 = sbr.rel (%p1282) target = $region101
        $region100: #{tpu_custom_call.1} parent=88 // pred_region
          %1285 = vst [vmem:[#allocation2] sm:$0xff] 0.0
        $region101: #{tpu_custom_call.1} parent=88 // pred_fallthru
          _
        %v1286 = vld [vmem:[#allocation2] sm:$0xff]
        %vm1295 = vcmask 1041409
        %v1296 = vsel %vm1295, %v1244, %v1238
        %vm1297 = vcmask 1042434
        %v1298 = vsel %vm1297, %v1250, %v1296
        %vm1299 = vcmask 1043459
        %v1300 = vsel %vm1299, %v1256, %v1298
        %vm1301 = vcmask 1044484
        %v1302 = vsel %vm1301, %v1262, %v1300
        %vm1303 = vcmask 1045509
        %v1304 = vsel %vm1303, %v1268, %v1302
        %vm1305 = vcmask 1046534
        %v1306 = vsel %vm1305, %v1274, %v1304
        %vm1307 = vcmask 1047559
        %v1308 = vsel %vm1307, %v1280, %v1306
        %v1310 = vadd.f32 %v1286, %v1308
        %1311 = vst [vmem:[#allocation2] sm:$0xff] %v1310
        %p1312 = scmp.eq.s32.totalorder %s28, 1
        // Predicated region
        $region102: #{tpu_custom_call.1} parent=88 // pred_check
          %p1313 = pneg %p1312
        $region103: #{tpu_custom_call.1} parent=88 // pred_check_branch
          %1315 = sbr.rel (%p1313) target = $region105
        $region104: #{tpu_custom_call.1} parent=88 // pred_region
          %v1316 = vld [vmem:[%s7] sm:$0x1]
          %v1317 = vld [vmem:[%s7 + $0x1] sm:$0x1]
          %v1318 = vld [vmem:[#allocation2] sm:$0xff]
          %v1319 = vpack.c.bf16 %v1318, %v1318
          %v1320 = vld [vmem:[%s4] sm:$0xf]
          %v1321 = vld [vmem:[%s4 + $0x4] sm:$0xf]
          %v1322 = vld [vmem:[%s4 + $0x8] sm:$0xf]
          %v1323 = vld [vmem:[%s4 + $0xc] sm:$0xf]
          %v1324 = vld [vmem:[%s4 + $0x10] sm:$0xf]
          %v1325 = vld [vmem:[%s4 + $0x14] sm:$0xf]
          %v1326 = vld [vmem:[%s4 + $0x18] sm:$0xf]
          %v1327 = vld [vmem:[%s4 + $0x1c] sm:$0xf]
          %v1328 = vld [vmem:[%s4 + $0x20] sm:$0xf]
          %v1329 = vld [vmem:[%s4 + $0x24] sm:$0xf]
          %v1330 = vld [vmem:[%s4 + $0x28] sm:$0xf]
          %v1331 = vld [vmem:[%s4 + $0x2c] sm:$0xf]
          %v1332 = vld [vmem:[%s4 + $0x30] sm:$0xf]
          %v1333 = vld [vmem:[%s4 + $0x34] sm:$0xf]
          %v1334 = vld [vmem:[%s4 + $0x38] sm:$0xf]
          %v1335 = vld [vmem:[%s4 + $0x3c] sm:$0xf]
          %v1336 = vlaneseq
          %v1337 = vshrl.u32 %v1336, 7
          %v1338 = vsub.s32 0, %v1337
          %v1339 = vrot.slane %v1316, %v1338
          %v1356 = vunpack.c.l.b16 %v1320
          %v1357 = vunpack.c.l.b16 %v1321
          %v1358 = vunpack.c.l.b16 %v1322
          %v1359 = vunpack.c.l.b16 %v1323
          %v1360 = vunpack.c.l.b16 %v1324
          %v1361 = vunpack.c.l.b16 %v1325
          %v1362 = vunpack.c.l.b16 %v1326
          %v1363 = vunpack.c.l.b16 %v1327
          %v1364 = vunpack.c.l.b16 %v1328
          %v1365 = vunpack.c.l.b16 %v1329
          %v1366 = vunpack.c.l.b16 %v1330
          %v1367 = vunpack.c.l.b16 %v1331
          %v1368 = vunpack.c.l.b16 %v1332
          %v1369 = vunpack.c.l.b16 %v1333
          %v1370 = vunpack.c.l.b16 %v1334
          %v1371 = vunpack.c.l.b16 %v1335
          %v1372 = vpack.c.b16 %v1357, %v1356
          %v1373 = vpack.c.b16 %v1359, %v1358
          %v1374 = vpack.c.b16 %v1361, %v1360
          %v1375 = vpack.c.b16 %v1363, %v1362
          %v1376 = vpack.c.b16 %v1365, %v1364
          %v1377 = vpack.c.b16 %v1367, %v1366
          %v1378 = vpack.c.b16 %v1369, %v1368
          %v1379 = vpack.c.b16 %v1371, %v1370
          %1388 = vmatprep.subr.bf16.mxu0 0
          %1389 = vmatpush1.bf16.msra.mxu0 %v1372
          %1390 = vmatprep.subr.bf16.mxu0 0
          %1391 = vmatpush1.bf16.msra.mxu0 %v1373
          %1392 = vmatprep.subr.bf16.mxu0 0
          %1393 = vmatpush1.bf16.msra.mxu0 %v1374
          %1394 = vmatprep.subr.bf16.mxu0 0
          %1395 = vmatpush1.bf16.msra.mxu0 %v1375
          %1396 = vmatprep.subr.bf16.mxu0 0
          %1397 = vmatpush1.bf16.msra.mxu0 %v1376
          %1398 = vmatprep.subr.bf16.mxu0 0
          %1399 = vmatpush1.bf16.msra.mxu0 %v1377
          %1400 = vmatprep.subr.bf16.mxu0 0
          %1401 = vmatpush1.bf16.msra.mxu0 %v1378
          %1402 = vmatprep.subr.bf16.mxu0 0
          %1403 = vmatpush1.bf16.msra.mxu0 %v1379
          %1404 = vmatprep.subr.bf16.mxu0 0
          %1405 = vmatpush1.bf16.msra.mxu0 0
          %1406 = vmatprep.subr.bf16.mxu0 0
          %1407 = vmatpush1.bf16.msra.mxu0 0
          %1408 = vmatprep.subr.bf16.mxu0 0
          %1409 = vmatpush1.bf16.msra.mxu0 0
          %1410 = vmatprep.subr.bf16.mxu0 0
          %1411 = vmatpush1.bf16.msra.mxu0 0
          %1412 = vmatprep.subr.bf16.mxu0 0
          %1413 = vmatpush1.bf16.msra.mxu0 0
          %1414 = vmatprep.subr.bf16.mxu0 0
          %1415 = vmatpush1.bf16.msra.mxu0 0
          %1416 = vmatprep.subr.bf16.mxu0 0
          %1417 = vmatpush1.bf16.msra.mxu0 0
          %1418 = vmatprep.subr.bf16.mxu0 0
          %1419 = vmatpush1.bf16.msra.mxu0 0
          %1420 = vmatprep.mubr.bf16.mxu0 0
          %1421 = vmatmul.mubr.bf16.gmra.mrb[0].mxu0 %v1319
          %v1422 = vpop.f32.mrb[0].mxu0
          %v1423 = vadd.f32 %v1339, %v1422
          %v1424 = vpop.f32.mrb[0].mxu0
          %v1425 = vpop.f32.mrb[0].mxu0
          %v1426 = vpop.f32.mrb[0].mxu0
          %1427 = vdwg.mxu0
          %v1428 = vmax.f32 %v1423, 0.0
          %v1429 = vpack.c.bf16 %v1428, %v1428
          %v1430 = vld [vmem:[%s5] sm:$0xf]
          %v1431 = vld [vmem:[%s5 + $0x4] sm:$0xf]
          %v1432 = vld [vmem:[%s5 + $0x8] sm:$0xf]
          %v1433 = vld [vmem:[%s5 + $0xc] sm:$0xf]
          %v1434 = vld [vmem:[%s5 + $0x10] sm:$0xf]
          %v1435 = vld [vmem:[%s5 + $0x14] sm:$0xf]
          %v1436 = vld [vmem:[%s5 + $0x18] sm:$0xf]
          %v1437 = vld [vmem:[%s5 + $0x1c] sm:$0xf]
          %v1438 = vld [vmem:[%s5 + $0x20] sm:$0xf]
          %v1439 = vld [vmem:[%s5 + $0x24] sm:$0xf]
          %v1440 = vld [vmem:[%s5 + $0x28] sm:$0xf]
          %v1441 = vld [vmem:[%s5 + $0x2c] sm:$0xf]
          %v1442 = vld [vmem:[%s5 + $0x30] sm:$0xf]
          %v1443 = vld [vmem:[%s5 + $0x34] sm:$0xf]
          %v1444 = vld [vmem:[%s5 + $0x38] sm:$0xf]
          %v1445 = vld [vmem:[%s5 + $0x3c] sm:$0xf]
          %v1446 = vlaneseq
          %v1447 = vshrl.u32 %v1446, 7
          %v1448 = vsub.s32 0, %v1447
          %v1449 = vrot.slane %v1317, %v1448
          %v1466 = vunpack.c.l.b16 %v1430
          %v1467 = vunpack.c.l.b16 %v1431
          %v1468 = vunpack.c.l.b16 %v1432
          %v1469 = vunpack.c.l.b16 %v1433
          %v1470 = vunpack.c.l.b16 %v1434
          %v1471 = vunpack.c.l.b16 %v1435
          %v1472 = vunpack.c.l.b16 %v1436
          %v1473 = vunpack.c.l.b16 %v1437
          %v1474 = vunpack.c.l.b16 %v1438
          %v1475 = vunpack.c.l.b16 %v1439
          %v1476 = vunpack.c.l.b16 %v1440
          %v1477 = vunpack.c.l.b16 %v1441
          %v1478 = vunpack.c.l.b16 %v1442
          %v1479 = vunpack.c.l.b16 %v1443
          %v1480 = vunpack.c.l.b16 %v1444
          %v1481 = vunpack.c.l.b16 %v1445
          %v1482 = vpack.c.b16 %v1467, %v1466
          %v1483 = vpack.c.b16 %v1469, %v1468
          %v1484 = vpack.c.b16 %v1471, %v1470
          %v1485 = vpack.c.b16 %v1473, %v1472
          %v1486 = vpack.c.b16 %v1475, %v1474
          %v1487 = vpack.c.b16 %v1477, %v1476
          %v1488 = vpack.c.b16 %v1479, %v1478
          %v1489 = vpack.c.b16 %v1481, %v1480
          %1498 = vmatprep.subr.bf16.mxu0 0
          %1499 = vmatpush1.bf16.msra.mxu0 %v1482
          %1500 = vmatprep.subr.bf16.mxu0 0
          %1501 = vmatpush1.bf16.msra.mxu0 %v1483
          %1502 = vmatprep.subr.bf16.mxu0 0
          %1503 = vmatpush1.bf16.msra.mxu0 %v1484
          %1504 = vmatprep.subr.bf16.mxu0 0
          %1505 = vmatpush1.bf16.msra.mxu0 %v1485
          %1506 = vmatprep.subr.bf16.mxu0 0
          %1507 = vmatpush1.bf16.msra.mxu0 %v1486
          %1508 = vmatprep.subr.bf16.mxu0 0
          %1509 = vmatpush1.bf16.msra.mxu0 %v1487
          %1510 = vmatprep.subr.bf16.mxu0 0
          %1511 = vmatpush1.bf16.msra.mxu0 %v1488
          %1512 = vmatprep.subr.bf16.mxu0 0
          %1513 = vmatpush1.bf16.msra.mxu0 %v1489
          %1514 = vmatprep.subr.bf16.mxu0 0
          %1515 = vmatpush1.bf16.msra.mxu0 0
          %1516 = vmatprep.subr.bf16.mxu0 0
          %1517 = vmatpush1.bf16.msra.mxu0 0
          %1518 = vmatprep.subr.bf16.mxu0 0
          %1519 = vmatpush1.bf16.msra.mxu0 0
          %1520 = vmatprep.subr.bf16.mxu0 0
          %1521 = vmatpush1.bf16.msra.mxu0 0
          %1522 = vmatprep.subr.bf16.mxu0 0
          %1523 = vmatpush1.bf16.msra.mxu0 0
          %1524 = vmatprep.subr.bf16.mxu0 0
          %1525 = vmatpush1.bf16.msra.mxu0 0
          %1526 = vmatprep.subr.bf16.mxu0 0
          %1527 = vmatpush1.bf16.msra.mxu0 0
          %1528 = vmatprep.subr.bf16.mxu0 0
          %1529 = vmatpush1.bf16.msra.mxu0 0
          %1530 = vmatprep.mubr.bf16.mxu0 0
          %1531 = vmatmul.mubr.bf16.gmra.mrb[0].mxu0 %v1429
          %v1532 = vpop.f32.mrb[0].mxu0
          %v1533 = vadd.f32 %v1449, %v1532
          %v1534 = vpop.f32.mrb[0].mxu0
          %v1535 = vpop.f32.mrb[0].mxu0
          %v1536 = vpop.f32.mrb[0].mxu0
          %1537 = vdwg.mxu0
          %1538 = vst [vmem:[%s403] sm:$0xff] %v1533
        $region105: #{tpu_custom_call.1} parent=88 // pred_fallthru
          _
        %s1539 = sand.u32 %s218, 1
        %s1540 = scalar_lea.sflag [#allocation6], %s1539
        %s1541 = sand.u32 %s218, 1
        %s1542 = smul.addr %s1541, 8
        %s1543 = scalar_lea.vmem [#allocation7], %s1542
        // Predicated region
        $region106: #{tpu_custom_call.1} parent=88 // pred_check
          %p1544 = pneg %p228
        $region107: #{tpu_custom_call.1} parent=88 // pred_check_branch
          %1546 = sbr.rel (%p1544) target = $region109
        $region108: #{tpu_custom_call.1} parent=88 // pred_region
          %s1548 = ssub.s32 128, 128
          %1549 = vsyncadd %s1540, %s1548
          %s1550 = smul.addr %s27, 128
          %s1551 = scalar_lea.hbm %s8, %s1550
          %s1553 = sshll.u32 %s1543, 4
          %s1554 = int_to_ptr.vmem [resolvable:$true] %s1553
          %1556 = dma.vmem_to_hbm [thread:$0]  %s1554, 128, %s1551, %s1540
        $region109: #{tpu_custom_call.1} parent=88 // pred_fallthru
          _
      $region89: #{tpu_custom_call.1} parent=5 // pred_fallthru
        _
      %p1557 = scmp.le.s32.totalorder 2, %s18
      // Predicated region
      $region110: #{tpu_custom_call.1} parent=5 // pred_check
        %p1558 = pneg %p1557
      $region111: #{tpu_custom_call.1} parent=5 // pred_check_branch
        %1560 = sbr.rel (%p1558) target = $region113
      $region112: #{tpu_custom_call.1} parent=5 // pred_region
        %s1561 = ssub.s32 %s18, 2
        // Predicated region
        $region114: #{tpu_custom_call.1} parent=112 // pred_check
          %p1562 = pneg %p234
        $region115: #{tpu_custom_call.1} parent=112 // pred_check_branch
          %1564 = sbr.rel (%p1562) target = $region117
        $region116: #{tpu_custom_call.1} parent=112 // pred_region
          %s1565 = sand.u32 %s219, 1
          %s1566 = scalar_lea.sflag [#allocation6], %s1565
          %s1567 = sand.u32 %s219, 1
          %s1568 = smul.addr %s1567, 8
          %s1569 = scalar_lea.vmem [#allocation7], %s1568
          %1570 = dma.done %s1566, 128
        $region117: #{tpu_custom_call.1} parent=112 // pred_fallthru
          _
      $region113: #{tpu_custom_call.1} parent=5 // pred_fallthru
        _
    $region6: #{tpu_custom_call.1} parent=1 // loop_footer
      %s22 = sadd.s32 1, %s18
    $region7: #{tpu_custom_call.1} parent=1 // loop_footer_branch
      %17 = sbr.rel target = $region3
    $region8: #{tpu_custom_call.1} parent=1 // loop_exit
      _
    %1571 = vsyncpa [#allocation5], 1
    %s1572 = scalar_lea.sflag [#allocation5], 1
    %1573 = vsyncpa %s1572, 1
    %1574 = vsyncpa [#allocation6], 1
    %s1575 = scalar_lea.sflag [#allocation6], 1
    %1576 = vsyncpa %s1575, 1

</llo_original>
